<compile_context>
chip_gen: v5e
topology: v5e:2x2
jax: 0.10.0
libtpu: 0.0.40
codegen_flags: <defaults>
</compile_context>

<pallas_src>
import functools

import jax
import jax.numpy as jnp
from jax.experimental import pallas as pl
from jax.experimental.pallas import tpu as pltpu

_BN_EPS = 1e-5


def _round_up(x, m):
    return ((x + m - 1) // m) * m


def _contrastive_projection_kernel(
    z_ref, w1_ref, gamma_ref, beta_ref, w2_ref, b2_ref,   # inputs
    o_ref,                                                 # output
    sum_ref, sumsq_ref, scale_ref, shift_ref,              # BN scratch
    *h_stash,                                              # optional Linear-1 stash
    n_rows, stash_h,
):
    """Grid = (pass, batch_tile).  Pass 0: batch stats (+ stash h).  Pass 1: apply."""
    p = pl.program_id(0)
    t = pl.program_id(1)
    h_ref = h_stash[0] if stash_h else None

    def linear1():
        # bf16 MXU operands, f32 accumulation.  The Linear-1 bias is omitted:
        # BatchNorm1d in training mode subtracts the batch mean, so a constant
        # per-feature bias cancels exactly and never reaches the output.
        return jnp.dot(z_ref[...], w1_ref[...], preferred_element_type=jnp.float32)

    @pl.when(p == 0)
    def _stats_pass():
        @pl.when(t == 0)
        def _init():
            sum_ref[...] = jnp.zeros_like(sum_ref)
            sumsq_ref[...] = jnp.zeros_like(sumsq_ref)

        a = linear1()
        if stash_h:
            h_ref[t] = a.astype(h_ref.dtype)
        # Zero-padded batch rows produce all-zero activations (no bias), so
        # they contribute nothing to sum/sumsq -- no row masking required.
        sum_ref[...] += jnp.sum(a, axis=0, keepdims=True)
        sumsq_ref[...] += jnp.sum(a * a, axis=0, keepdims=True)
        # NOTE: no o_ref write here.  The output index_map keeps pass 0 on
        # block (0, 0), which pass 1 overwrites before its first writeback.

    @pl.when(p == 1)
    def _apply_pass():
        @pl.when(t == 0)
        def _fold_bn():
            # Fold training-mode BatchNorm1d (batch mean, biased batch var)
            # + affine into a single per-feature scale/shift.
            inv_n = 1.0 / jnp.float32(n_rows)
            mean = sum_ref[...] * inv_n
            var = jnp.maximum(sumsq_ref[...] * inv_n - mean * mean, 0.0)
            scale = gamma_ref[...] * jax.lax.rsqrt(var + _BN_EPS)
            scale_ref[...] = scale
            shift_ref[...] = beta_ref[...] - mean * scale

        a = h_ref[t].astype(jnp.float32) if stash_h else linear1()
        # Folded BN + ReLU (2 VPU ops per element post-matmul).
        h = jnp.maximum(a * scale_ref[...] + shift_ref[...], 0.0)
        # Linear2 (bf16 MXU, f32 accumulate) + bias.
        out = jnp.dot(h.astype(jnp.bfloat16), w2_ref[...],
                      preferred_element_type=jnp.float32) + b2_ref[...]
        # F.normalize(dim=-1): out / max(||out||, 1e-12) == out * rsqrt(max(ss, 1e-24)).
        ss = jnp.sum(out * out, axis=-1, keepdims=True)
        o_ref[...] = (out * jax.lax.rsqrt(jnp.maximum(ss, 1e-24))).astype(o_ref.dtype)


def contrastive_projection(z, w1, b1, gamma, beta, w2, b2, *,
                           tile_n=None, allow_stash=True):
    """z: (N, input_dim).  Weights pre-transposed as (in, out).
    Returns (N, output_dim) f32 with L2-normalized rows.

    b1 is accepted for API parity but is folded away analytically: training-
    mode BatchNorm removes the batch mean, so a per-feature pre-BN bias cancels
    exactly and cannot affect the output."""
    del b1
    n, d_in = z.shape
    d_out = w2.shape[1]

    # Lane-dense feature / output padding.
    d_pad = max(_round_up(d_in, 128), 128)
    o_pad = max(_round_up(d_out, 128), 128)
    n_pad8 = max(_round_up(n, 8), 8)

    # ---- per-device VMEM budget -> stash decision, tile_n, vmem limit ----
    try:
        vmem_cap = int(pltpu.get_tpu_info().vmem_capacity_bytes)
    except Exception:               # not queryable -> assume v7x's 64 MiB
        vmem_cap = 64 << 20
    vmem_budget = min(int(vmem_cap * 3 // 4), 100 << 20)

    # Resident (single-buffered) weights + small vectors + BN scratch (f32).
    fixed_bytes = ((d_pad * d_pad + d_pad * o_pad) * 2
                   + 4 * 8 * d_pad * 4 + 2 * 8 * d_pad * 4 + 8 * o_pad * 4)
    # Streaming cost per batch row: double-buffered bf16 z tile + f32 out tile.
    row_bytes = 2 * d_pad * 2 + 2 * o_pad * 4

    budget_left = vmem_budget - fixed_bytes
    stash_dtype = None
    if allow_stash:
        for cand_dtype, itemsize in ((jnp.float32, 4), (jnp.bfloat16, 2)):
            need = (n_pad8 + 1024) * d_pad * itemsize   # worst case incl. tail tile
            if need <= budget_left - 64 * row_bytes:
                stash_dtype = cand_dtype
                budget_left -= need
                break
    stash = stash_dtype is not None

    tile_cap = max(8, min(1024, (budget_left // max(row_bytes, 1)) // 8 * 8))
    cap = tile_cap if tile_n is None else max(8, (min(int(tile_n), tile_cap) // 8) * 8)
    tn = max(8, (min(cap, n_pad8) // 8) * 8)
    # Prefer an exact divisor of the 8-padded batch (no dead tail rows) within
    # a 2x window; otherwise accept at most tn-8 rows of batch padding.
    for cand in range(tn, max(tn // 2, 8) - 1, -8):
        if n_pad8 % cand == 0:
            tn = cand
            break
    n_pad = _round_up(n_pad8, tn)
    n_tiles = n_pad // tn

    # ---- padded operands (z streamed as bf16; weights cast once to bf16) ----
    f32, bf16 = jnp.float32, jnp.bfloat16
    zp = jnp.zeros((n_pad, d_pad), bf16).at[:n, :d_in].set(z.astype(bf16))
    w1p = jnp.zeros((d_pad, d_pad), bf16).at[:d_in, :d_in].set(w1.astype(bf16))
    w2p = jnp.zeros((d_pad, o_pad), bf16).at[:d_in, :d_out].set(w2.astype(bf16))
    gp = jnp.zeros((1, d_pad), f32).at[:, :d_in].set(gamma.reshape(1, -1).astype(f32))
    bp = jnp.zeros((1, d_pad), f32).at[:, :d_in].set(beta.reshape(1, -1).astype(f32))
    b2p = jnp.zeros((1, o_pad), f32).at[:, :d_out].set(b2.reshape(1, -1).astype(f32))

    kernel = functools.partial(_contrastive_projection_kernel,
                               n_rows=n, stash_h=stash)

    # z is only needed in pass 0 when h is stashed; park it on block 0 in
    # pass 1 so it is not re-streamed from HBM.
    z_map = (lambda p_, t_: (t_ * (1 - p_), 0)) if stash else (lambda p_, t_: (t_, 0))
    # Output: pass 0 parks on block (0, 0) (never written, never flushed before
    # pass 1 overwrites it); pass 1 walks the batch tiles.
    out_map = lambda p_, t_: (t_ * p_, 0)

    scratch = [
        pltpu.VMEM((1, d_pad), f32),   # running sum
        pltpu.VMEM((1, d_pad), f32),   # running sum of squares
        pltpu.VMEM((1, d_pad), f32),   # folded BN scale
        pltpu.VMEM((1, d_pad), f32),   # folded BN shift
    ]
    if stash:
        scratch.append(pltpu.VMEM((n_tiles, tn, d_pad), stash_dtype))

    l1_passes = 1 if stash else 2
    flops = int(2 * l1_passes * n_pad * d_pad * d_pad + 2 * n_pad * d_pad * o_pad)
    bytes_accessed = int(l1_passes * zp.size * 2 + w1p.size * 2 + w2p.size * 2
                         + (gp.size + bp.size + b2p.size) * 4 + n_pad * o_pad * 4)
    cost = pl.CostEstimate(flops=flops, transcendentals=int(n_pad + d_pad),
                           bytes_accessed=bytes_accessed)

    vmem_limit = int(min(max(vmem_budget, 32 << 20), vmem_cap))

    def _build(buffered_weights):
        def const_spec(shape):
            if buffered_weights:
                # Constant operands are fetched once; no need for 2x buffers.
                return pl.BlockSpec(shape, lambda p_, t_: (0, 0),
                                    pipeline_mode=pl.Buffered(1))
            return pl.BlockSpec(shape, lambda p_, t_: (0, 0))

        return pl.pallas_call(
            kernel,
            out_shape=jax.ShapeDtypeStruct((n_pad, o_pad), jnp.float32),
            grid_spec=pltpu.PrefetchScalarGridSpec(
                num_scalar_prefetch=0,
                grid=(2, n_tiles),
                in_specs=[
                    pl.BlockSpec((tn, d_pad), z_map),   # z (bf16)
                    const_spec((d_pad, d_pad)),         # w1 (bf16)
                    const_spec((1, d_pad)),             # gamma
                    const_spec((1, d_pad)),             # beta
                    const_spec((d_pad, o_pad)),         # w2 (bf16)
                    const_spec((1, o_pad)),             # b2
                ],
                out_specs=pl.BlockSpec((tn, o_pad), out_map),
                scratch_shapes=scratch,
            ),
            compiler_params=pltpu.CompilerParams(
                # Both axes are sequential: pass 0 accumulates batch statistics
                # across tiles and pass 1 depends on the completed statistics.
                dimension_semantics=("arbitrary", "arbitrary"),
                vmem_limit_bytes=vmem_limit,
            ),
            cost_estimate=cost,
        )

    args = (zp, w1p, gp, bp, w2p, b2p)
    try:
        out_padded = _build(buffered_weights=True)(*args)
    except Exception:
        # pipeline_mode=pl.Buffered(1) unsupported on this jax/libtpu combo --
        # fall back to default (double-buffered) resident operands.
        out_padded = _build(buffered_weights=False)(*args)

    return out_padded[:n, :d_out]


def _reference(z, w1, b1, gamma, beta, w2, b2):
    h = z @ w1 + b1
    mean = jnp.mean(h, axis=0, keepdims=True)
    var = jnp.mean((h - mean) ** 2, axis=0, keepdims=True)
    h = (h - mean) / jnp.sqrt(var + _BN_EPS) * gamma + beta
    h = jnp.maximum(h, 0.0)
    out = h @ w2 + b2
    norm = jnp.sqrt(jnp.sum(out * out, axis=-1, keepdims=True))
    return out / jnp.maximum(norm, 1e-12)


if __name__ == "__main__":
    key = jax.random.PRNGKey(0)
    batch, input_dim, output_dim = 8, 32, 16
    kz, kw1, kb1, kg, kb, kw2, kb2, kz2 = jax.random.split(key, 8)

    bound = 1.0 / (input_dim ** 0.5)
    w1 = jax.random.uniform(kw1, (input_dim, input_dim), jnp.float32, -bound, bound)
    b1 = jax.random.uniform(kb1, (1, input_dim), jnp.float32, -bound, bound)
    gamma = 1.0 + 0.1 * jax.random.uniform(kg, (1, input_dim), jnp.float32, -1.0, 1.0)
    beta = 0.1 * jax.random.normal(kb, (1, input_dim), jnp.float32)
    w2 = jax.random.uniform(kw2, (input_dim, output_dim), jnp.float32, -bound, bound)
    b2 = jax.random.uniform(kb2, (1, output_dim), jnp.float32, -bound, bound)

    # Case 1: single batch tile, VMEM-stashed Linear-1 activations.
    z = jax.random.normal(kz, (batch, input_dim), jnp.float32)
    out = jax.block_until_ready(contrastive_projection(z, w1, b1, gamma, beta, w2, b2))
    ref = _reference(z, w1, b1, gamma, beta, w2, b2)
    assert out.shape == (batch, output_dim)
    assert jnp.allclose(out, ref, atol=2e-2, rtol=2e-2), "mismatch vs JAX reference (case 1)"

    # Case 2: multi-tile batch with padded tail rows (cross-tile BN stats + stash).
    z2 = jax.random.normal(kz2, (12, input_dim), jnp.float32)
    out2 = jax.block_until_ready(
        contrastive_projection(z2, w1, b1, gamma, beta, w2, b2, tile_n=8))
    ref2 = _reference(z2, w1, b1, gamma, beta, w2, b2)
    assert out2.shape == (12, output_dim)
    assert jnp.allclose(out2, ref2, atol=2e-2, rtol=2e-2), "mismatch vs JAX reference (case 2)"

    # Case 3: same shapes, exercising the recompute fallback (no VMEM h stash).
    out3 = jax.block_until_ready(
        contrastive_projection(z2, w1, b1, gamma, beta, w2, b2, tile_n=8,
                               allow_stash=False))
    assert jnp.allclose(out3, ref2, atol=2e-2, rtol=2e-2), "mismatch vs JAX reference (case 3)"

    print("KERNEL_OK")
</pallas_src>

<mosaic_0001>
module attributes {stable_mosaic.version = 11 : i64} {
  func.func @_contrastive_projection_kernel(%arg0: i32, %arg1: i32, %arg2: memref<8x128xbf16, #tpu.memory_space<vmem>>, %arg3: memref<128x128xbf16, #tpu.memory_space<vmem>>, %arg4: memref<1x128xf32, #tpu.memory_space<vmem>>, %arg5: memref<1x128xf32, #tpu.memory_space<vmem>>, %arg6: memref<128x128xbf16, #tpu.memory_space<vmem>>, %arg7: memref<1x128xf32, #tpu.memory_space<vmem>>, %arg8: memref<8x128xf32, #tpu.memory_space<vmem>>, %arg9: memref<1x128xf32, #tpu.memory_space<vmem>>, %arg10: memref<1x128xf32, #tpu.memory_space<vmem>>, %arg11: memref<1x128xf32, #tpu.memory_space<vmem>>, %arg12: memref<1x128xf32, #tpu.memory_space<vmem>>, %arg13: memref<1x8x128xf32, #tpu.memory_space<vmem>>) attributes {dimension_semantics = [#tpu.dimension_semantics<arbitrary>, #tpu.dimension_semantics<arbitrary>], iteration_bounds = array<i64: 2, 1>, scalar_prefetch = 0 : i64, scratch_operands = 5 : i64, tpu.core_type = #tpu.core_type<tc>, window_params = [{transform_indices = @transform_0, window_bounds = array<i64: 8, 128>}, {pipeline_mode = #tpu.pipeline_mode<synchronous>, transform_indices = @transform_1, window_bounds = array<i64: 128, 128>}, {pipeline_mode = #tpu.pipeline_mode<synchronous>, transform_indices = @transform_2, window_bounds = array<i64: 1, 128>}, {pipeline_mode = #tpu.pipeline_mode<synchronous>, transform_indices = @transform_3, window_bounds = array<i64: 1, 128>}, {pipeline_mode = #tpu.pipeline_mode<synchronous>, transform_indices = @transform_4, window_bounds = array<i64: 128, 128>}, {pipeline_mode = #tpu.pipeline_mode<synchronous>, transform_indices = @transform_5, window_bounds = array<i64: 1, 128>}, {transform_indices = @transform_6, window_bounds = array<i64: 8, 128>}]} {
    %c0_i32 = arith.constant 0 : i32
    %0 = arith.cmpi eq, %arg0, %c0_i32 : i32
    %1 = arith.extui %0 : i1 to i32
    %c0_i32_0 = arith.constant 0 : i32
    %2 = arith.cmpi ne, %1, %c0_i32_0 : i32
    scf.if %2 {
      %c0_i32_2 = arith.constant 0 : i32
      %6 = arith.cmpi eq, %arg1, %c0_i32_2 : i32
      %7 = arith.extui %6 : i1 to i32
      %c0_i32_3 = arith.constant 0 : i32
      %8 = arith.cmpi ne, %7, %c0_i32_3 : i32
      scf.if %8 {
        %cst_19 = arith.constant 0.000000e+00 : f32
        %27 = vector.broadcast %cst_19 : f32 to vector<1x128xf32>
        %c0_20 = arith.constant 0 : index
        %c0_21 = arith.constant 0 : index
        %28 = vector.load %arg9[%c0_20, %c0_21] : memref<1x128xf32, #tpu.memory_space<vmem>>, vector<1x128xf32>
        tpu.vector_store %arg9[%c0_20, %c0_21], %27 {strides = array<i32>} : memref<1x128xf32, #tpu.memory_space<vmem>>, vector<1x128xf32>,
        %cst_22 = arith.constant 0.000000e+00 : f32
        %29 = vector.broadcast %cst_22 : f32 to vector<1x128xf32>
        %c0_23 = arith.constant 0 : index
        %c0_24 = arith.constant 0 : index
        %30 = vector.load %arg10[%c0_23, %c0_24] : memref<1x128xf32, #tpu.memory_space<vmem>>, vector<1x128xf32>
        tpu.vector_store %arg10[%c0_23, %c0_24], %29 {strides = array<i32>} : memref<1x128xf32, #tpu.memory_space<vmem>>, vector<1x128xf32>,
      } else {
      }
      %c0 = arith.constant 0 : index
      %c0_4 = arith.constant 0 : index
      %9 = vector.load %arg2[%c0, %c0_4] : memref<8x128xbf16, #tpu.memory_space<vmem>>, vector<8x128xbf16>
      %c0_5 = arith.constant 0 : index
      %c0_6 = arith.constant 0 : index
      %10 = vector.load %arg3[%c0_5, %c0_6] : memref<128x128xbf16, #tpu.memory_space<vmem>>, vector<128x128xbf16>
      %cst = arith.constant dense<0.000000e+00> : vector<8x128xf32>
      %11 = tpu.matmul %9, %10, %cst {dimension_numbers = #tpu.dot_dimension_numbers<[1], [0], [0], [1], [0, 0, 1, 1], [], []>} : vector<8x128xbf16>, vector<128x128xbf16>, vector<8x128xf32> -> vector<8x128xf32>
      %12 = arith.index_cast %arg1 : i32 to index
      %c0_7 = arith.constant 0 : index
      %c0_8 = arith.constant 0 : index
      %13 = vector.load %arg13[%12, %c0_7, %c0_8] : memref<1x8x128xf32, #tpu.memory_space<vmem>>, vector<1x8x128xf32>
      %14 = vector.shape_cast %13 : vector<1x8x128xf32> to vector<8x128xf32>
      %15 = vector.shape_cast %11 : vector<8x128xf32> to vector<1x8x128xf32>
      tpu.vector_store %arg13[%12, %c0_7, %c0_8], %15 {strides = array<i32>} : memref<1x8x128xf32, #tpu.memory_space<vmem>>, vector<1x8x128xf32>,
      %c0_9 = arith.constant 0 : index
      %c0_10 = arith.constant 0 : index
      %16 = vector.load %arg9[%c0_9, %c0_10] : memref<1x128xf32, #tpu.memory_space<vmem>>, vector<1x128xf32>
      %cst_11 = arith.constant dense<0.000000e+00> : vector<128xf32>
      %17 = vector.multi_reduction <add>, %11, %cst_11 [0] : vector<8x128xf32> to vector<128xf32>
      %18 = vector.shape_cast %17 : vector<128xf32> to vector<1x128xf32>
      %19 = arith.addf %16, %18 : vector<1x128xf32>
      %c0_12 = arith.constant 0 : index
      %c0_13 = arith.constant 0 : index
      %20 = vector.load %arg9[%c0_12, %c0_13] : memref<1x128xf32, #tpu.memory_space<vmem>>, vector<1x128xf32>
      tpu.vector_store %arg9[%c0_12, %c0_13], %19 {strides = array<i32>} : memref<1x128xf32, #tpu.memory_space<vmem>>, vector<1x128xf32>,
      %c0_14 = arith.constant 0 : index
      %c0_15 = arith.constant 0 : index
      %21 = vector.load %arg10[%c0_14, %c0_15] : memref<1x128xf32, #tpu.memory_space<vmem>>, vector<1x128xf32>
      %22 = arith.mulf %11, %11 : vector<8x128xf32>
      %cst_16 = arith.constant dense<0.000000e+00> : vector<128xf32>
      %23 = vector.multi_reduction <add>, %22, %cst_16 [0] : vector<8x128xf32> to vector<128xf32>
      %24 = vector.shape_cast %23 : vector<128xf32> to vector<1x128xf32>
      %25 = arith.addf %21, %24 : vector<1x128xf32>
      %c0_17 = arith.constant 0 : index
      %c0_18 = arith.constant 0 : index
      %26 = vector.load %arg10[%c0_17, %c0_18] : memref<1x128xf32, #tpu.memory_space<vmem>>, vector<1x128xf32>
      tpu.vector_store %arg10[%c0_17, %c0_18], %25 {strides = array<i32>} : memref<1x128xf32, #tpu.memory_space<vmem>>, vector<1x128xf32>,
    } else {
    }
    %c1_i32 = arith.constant 1 : i32
    %3 = arith.cmpi eq, %arg0, %c1_i32 : i32
    %4 = arith.extui %3 : i1 to i32
    %c0_i32_1 = arith.constant 0 : i32
    %5 = arith.cmpi ne, %4, %c0_i32_1 : i32
    scf.if %5 {
      %c0_i32_2 = arith.constant 0 : i32
      %6 = arith.cmpi eq, %arg1, %c0_i32_2 : i32
      %7 = arith.extui %6 : i1 to i32
      %c0_i32_3 = arith.constant 0 : i32
      %8 = arith.cmpi ne, %7, %c0_i32_3 : i32
      scf.if %8 {
        %cst_18 = arith.constant 1.000000e+00 : f32
        %cst_19 = arith.constant 8.000000e+00 : f32
        %35 = arith.divf %cst_18, %cst_19 : f32
        %c0_20 = arith.constant 0 : index
        %c0_21 = arith.constant 0 : index
        %36 = vector.load %arg9[%c0_20, %c0_21] : memref<1x128xf32, #tpu.memory_space<vmem>>, vector<1x128xf32>
        %37 = vector.broadcast %35 : f32 to vector<1x128xf32>
        %38 = arith.mulf %36, %37 : vector<1x128xf32>
        %c0_22 = arith.constant 0 : index
        %c0_23 = arith.constant 0 : index
        %39 = vector.load %arg10[%c0_22, %c0_23] : memref<1x128xf32, #tpu.memory_space<vmem>>, vector<1x128xf32>
        %40 = vector.broadcast %35 : f32 to vector<1x128xf32>
        %41 = arith.mulf %39, %40 : vector<1x128xf32>
        %42 = arith.mulf %38, %38 : vector<1x128xf32>
        %43 = arith.subf %41, %42 : vector<1x128xf32>
        %cst_24 = arith.constant 0.000000e+00 : f32
        %44 = vector.broadcast %cst_24 : f32 to vector<1x128xf32>
        %45 = arith.maximumf %43, %44 : vector<1x128xf32>
        %c0_25 = arith.constant 0 : index
        %c0_26 = arith.constant 0 : index
        %46 = vector.load %arg4[%c0_25, %c0_26] : memref<1x128xf32, #tpu.memory_space<vmem>>, vector<1x128xf32>
        %cst_27 = arith.constant 9.99999974E-6 : f32
        %47 = vector.broadcast %cst_27 : f32 to vector<1x128xf32>
        %48 = arith.addf %45, %47 : vector<1x128xf32>
        %49 = math.rsqrt %48 : vector<1x128xf32>
        %50 = arith.mulf %46, %49 : vector<1x128xf32>
        %c0_28 = arith.constant 0 : index
        %c0_29 = arith.constant 0 : index
        %51 = vector.load %arg11[%c0_28, %c0_29] : memref<1x128xf32, #tpu.memory_space<vmem>>, vector<1x128xf32>
        tpu.vector_store %arg11[%c0_28, %c0_29], %50 {strides = array<i32>} : memref<1x128xf32, #tpu.memory_space<vmem>>, vector<1x128xf32>,
        %c0_30 = arith.constant 0 : index
        %c0_31 = arith.constant 0 : index
        %52 = vector.load %arg5[%c0_30, %c0_31] : memref<1x128xf32, #tpu.memory_space<vmem>>, vector<1x128xf32>
        %53 = arith.mulf %38, %50 : vector<1x128xf32>
        %54 = arith.subf %52, %53 : vector<1x128xf32>
        %c0_32 = arith.constant 0 : index
        %c0_33 = arith.constant 0 : index
        %55 = vector.load %arg12[%c0_32, %c0_33] : memref<1x128xf32, #tpu.memory_space<vmem>>, vector<1x128xf32>
        tpu.vector_store %arg12[%c0_32, %c0_33], %54 {strides = array<i32>} : memref<1x128xf32, #tpu.memory_space<vmem>>, vector<1x128xf32>,
      } else {
      }
      %9 = arith.index_cast %arg1 : i32 to index
      %c0 = arith.constant 0 : index
      %c0_4 = arith.constant 0 : index
      %10 = vector.load %arg13[%9, %c0, %c0_4] : memref<1x8x128xf32, #tpu.memory_space<vmem>>, vector<1x8x128xf32>
      %11 = vector.shape_cast %10 : vector<1x8x128xf32> to vector<8x128xf32>
      %c0_5 = arith.constant 0 : index
      %c0_6 = arith.constant 0 : index
      %12 = vector.load %arg11[%c0_5, %c0_6] : memref<1x128xf32, #tpu.memory_space<vmem>>, vector<1x128xf32>
      %13 = vector.broadcast %12 : vector<1x128xf32> to vector<8x128xf32>
      %14 = arith.mulf %11, %13 : vector<8x128xf32>
      %c0_7 = arith.constant 0 : index
      %c0_8 = arith.constant 0 : index
      %15 = vector.load %arg12[%c0_7, %c0_8] : memref<1x128xf32, #tpu.memory_space<vmem>>, vector<1x128xf32>
      %16 = vector.broadcast %15 : vector<1x128xf32> to vector<8x128xf32>
      %17 = arith.addf %14, %16 : vector<8x128xf32>
      %cst = arith.constant 0.000000e+00 : f32
      %18 = vector.broadcast %cst : f32 to vector<8x128xf32>
      %19 = arith.maximumf %17, %18 : vector<8x128xf32>
      %20 = arith.truncf %19 : vector<8x128xf32> to vector<8x128xbf16>
      %c0_9 = arith.constant 0 : index
      %c0_10 = arith.constant 0 : index
      %21 = vector.load %arg6[%c0_9, %c0_10] : memref<128x128xbf16, #tpu.memory_space<vmem>>, vector<128x128xbf16>
      %cst_11 = arith.constant dense<0.000000e+00> : vector<8x128xf32>
      %22 = tpu.matmul %20, %21, %cst_11 {dimension_numbers = #tpu.dot_dimension_numbers<[1], [0], [0], [1], [0, 0, 1, 1], [], []>} : vector<8x128xbf16>, vector<128x128xbf16>, vector<8x128xf32> -> vector<8x128xf32>
      %c0_12 = arith.constant 0 : index
      %c0_13 = arith.constant 0 : index
      %23 = vector.load %arg7[%c0_12, %c0_13] : memref<1x128xf32, #tpu.memory_space<vmem>>, vector<1x128xf32>
      %24 = vector.broadcast %23 : vector<1x128xf32> to vector<8x128xf32>
      %25 = arith.addf %22, %24 : vector<8x128xf32>
      %26 = arith.mulf %25, %25 : vector<8x128xf32>
      %cst_14 = arith.constant dense<0.000000e+00> : vector<8xf32>
      %27 = vector.multi_reduction <add>, %26, %cst_14 [1] : vector<8x128xf32> to vector<8xf32>
      %28 = vector.shape_cast %27 : vector<8xf32> to vector<8x1xf32>
      %cst_15 = arith.constant 1.000000e-24 : f32
      %29 = vector.broadcast %cst_15 : f32 to vector<8x1xf32>
      %30 = arith.maximumf %28, %29 : vector<8x1xf32>
      %31 = math.rsqrt %30 : vector<8x1xf32>
      %32 = vector.broadcast %31 : vector<8x1xf32> to vector<8x128xf32>
      %33 = arith.mulf %25, %32 : vector<8x128xf32>
      %c0_16 = arith.constant 0 : index
      %c0_17 = arith.constant 0 : index
      %34 = vector.load %arg8[%c0_16, %c0_17] : memref<8x128xf32, #tpu.memory_space<vmem>>, vector<8x128xf32>
      tpu.vector_store %arg8[%c0_16, %c0_17], %33 {strides = array<i32>} : memref<8x128xf32, #tpu.memory_space<vmem>>, vector<8x128xf32>,
    } else {
    }
    return
  }
  func.func @transform_0(%arg0: i32, %arg1: i32) -> (i32, i32) {
    %c1_i32 = arith.constant 1 : i32
    %0 = arith.subi %c1_i32, %arg0 : i32
    %1 = arith.muli %arg1, %0 : i32
    %c0_i32 = arith.constant 0 : i32
    %c0_i32_0 = arith.constant 0 : i32
    return %1, %c0_i32 : i32, i32
  }
  func.func @transform_1(%arg0: i32, %arg1: i32) -> (i32, i32) {
    %c0_i32 = arith.constant 0 : i32
    %c0_i32_0 = arith.constant 0 : i32
    %c0_i32_1 = arith.constant 0 : i32
    return %c0_i32, %c0_i32_0 : i32, i32
  }
  func.func @transform_2(%arg0: i32, %arg1: i32) -> (i32, i32) {
    %c0_i32 = arith.constant 0 : i32
    %c0_i32_0 = arith.constant 0 : i32
    %c0_i32_1 = arith.constant 0 : i32
    return %c0_i32, %c0_i32_0 : i32, i32
  }
  func.func @transform_3(%arg0: i32, %arg1: i32) -> (i32, i32) {
    %c0_i32 = arith.constant 0 : i32
    %c0_i32_0 = arith.constant 0 : i32
    %c0_i32_1 = arith.constant 0 : i32
    return %c0_i32, %c0_i32_0 : i32, i32
  }
  func.func @transform_4(%arg0: i32, %arg1: i32) -> (i32, i32) {
    %c0_i32 = arith.constant 0 : i32
    %c0_i32_0 = arith.constant 0 : i32
    %c0_i32_1 = arith.constant 0 : i32
    return %c0_i32, %c0_i32_0 : i32, i32
  }
  func.func @transform_5(%arg0: i32, %arg1: i32) -> (i32, i32) {
    %c0_i32 = arith.constant 0 : i32
    %c0_i32_0 = arith.constant 0 : i32
    %c0_i32_1 = arith.constant 0 : i32
    return %c0_i32, %c0_i32_0 : i32, i32
  }
  func.func @transform_6(%arg0: i32, %arg1: i32) -> (i32, i32) {
    %0 = arith.muli %arg1, %arg0 : i32
    %c0_i32 = arith.constant 0 : i32
    %c0_i32_0 = arith.constant 0 : i32
    return %0, %c0_i32 : i32, i32
  }
}

module attributes {stable_mosaic.version = 11 : i64} {
  func.func @_contrastive_projection_kernel(%arg0: i32, %arg1: i32, %arg2: memref<8x128xbf16, #tpu.memory_space<vmem>>, %arg3: memref<128x128xbf16, #tpu.memory_space<vmem>>, %arg4: memref<1x128xf32, #tpu.memory_space<vmem>>, %arg5: memref<1x128xf32, #tpu.memory_space<vmem>>, %arg6: memref<128x128xbf16, #tpu.memory_space<vmem>>, %arg7: memref<1x128xf32, #tpu.memory_space<vmem>>, %arg8: memref<8x128xf32, #tpu.memory_space<vmem>>, %arg9: memref<1x128xf32, #tpu.memory_space<vmem>>, %arg10: memref<1x128xf32, #tpu.memory_space<vmem>>, %arg11: memref<1x128xf32, #tpu.memory_space<vmem>>, %arg12: memref<1x128xf32, #tpu.memory_space<vmem>>, %arg13: memref<1x8x128xf32, #tpu.memory_space<vmem>>) attributes {dimension_semantics = [#tpu.dimension_semantics<arbitrary>, #tpu.dimension_semantics<arbitrary>], iteration_bounds = array<i64: 2, 1>, scalar_prefetch = 0 : i64, scratch_operands = 5 : i64, tpu.core_type = #tpu.core_type<tc>, window_params = [{transform_indices = @transform_0, window_bounds = array<i64: 8, 128>}, {pipeline_mode = #tpu.pipeline_mode<synchronous>, transform_indices = @transform_1, window_bounds = array<i64: 128, 128>}, {pipeline_mode = #tpu.pipeline_mode<synchronous>, transform_indices = @transform_2, window_bounds = array<i64: 1, 128>}, {pipeline_mode = #tpu.pipeline_mode<synchronous>, transform_indices = @transform_3, window_bounds = array<i64: 1, 128>}, {pipeline_mode = #tpu.pipeline_mode<synchronous>, transform_indices = @transform_4, window_bounds = array<i64: 128, 128>}, {pipeline_mode = #tpu.pipeline_mode<synchronous>, transform_indices = @transform_5, window_bounds = array<i64: 1, 128>}, {transform_indices = @transform_6, window_bounds = array<i64: 8, 128>}]} {
    %c0_i32 = arith.constant 0 : i32
    %0 = arith.cmpi eq, %arg0, %c0_i32 : i32
    %1 = arith.extui %0 : i1 to i32
    %c0_i32_0 = arith.constant 0 : i32
    %2 = arith.cmpi ne, %1, %c0_i32_0 : i32
    scf.if %2 {
      %c0_i32_2 = arith.constant 0 : i32
      %6 = arith.cmpi eq, %arg1, %c0_i32_2 : i32
      %7 = arith.extui %6 : i1 to i32
      %c0_i32_3 = arith.constant 0 : i32
      %8 = arith.cmpi ne, %7, %c0_i32_3 : i32
      scf.if %8 {
        %cst_19 = arith.constant 0.000000e+00 : f32
        %27 = vector.broadcast %cst_19 : f32 to vector<1x128xf32>
        %c0_20 = arith.constant 0 : index
        %c0_21 = arith.constant 0 : index
        %28 = vector.load %arg9[%c0_20, %c0_21] : memref<1x128xf32, #tpu.memory_space<vmem>>, vector<1x128xf32>
        tpu.vector_store %arg9[%c0_20, %c0_21], %27 {strides = array<i32>} : memref<1x128xf32, #tpu.memory_space<vmem>>, vector<1x128xf32>,
        %cst_22 = arith.constant 0.000000e+00 : f32
        %29 = vector.broadcast %cst_22 : f32 to vector<1x128xf32>
        %c0_23 = arith.constant 0 : index
        %c0_24 = arith.constant 0 : index
        %30 = vector.load %arg10[%c0_23, %c0_24] : memref<1x128xf32, #tpu.memory_space<vmem>>, vector<1x128xf32>
        tpu.vector_store %arg10[%c0_23, %c0_24], %29 {strides = array<i32>} : memref<1x128xf32, #tpu.memory_space<vmem>>, vector<1x128xf32>,
      } else {
      }
      %c0 = arith.constant 0 : index
      %c0_4 = arith.constant 0 : index
      %9 = vector.load %arg2[%c0, %c0_4] : memref<8x128xbf16, #tpu.memory_space<vmem>>, vector<8x128xbf16>
      %c0_5 = arith.constant 0 : index
      %c0_6 = arith.constant 0 : index
      %10 = vector.load %arg3[%c0_5, %c0_6] : memref<128x128xbf16, #tpu.memory_space<vmem>>, vector<128x128xbf16>
      %cst = arith.constant dense<0.000000e+00> : vector<8x128xf32>
      %11 = tpu.matmul %9, %10, %cst {dimension_numbers = #tpu.dot_dimension_numbers<[1], [0], [0], [1], [0, 0, 1, 1], [], []>} : vector<8x128xbf16>, vector<128x128xbf16>, vector<8x128xf32> -> vector<8x128xf32>
      %12 = arith.index_cast %arg1 : i32 to index
      %c0_7 = arith.constant 0 : index
      %c0_8 = arith.constant 0 : index
      %13 = vector.load %arg13[%12, %c0_7, %c0_8] : memref<1x8x128xf32, #tpu.memory_space<vmem>>, vector<1x8x128xf32>
      %14 = vector.shape_cast %13 : vector<1x8x128xf32> to vector<8x128xf32>
      %15 = vector.shape_cast %11 : vector<8x128xf32> to vector<1x8x128xf32>
      tpu.vector_store %arg13[%12, %c0_7, %c0_8], %15 {strides = array<i32>} : memref<1x8x128xf32, #tpu.memory_space<vmem>>, vector<1x8x128xf32>,
      %c0_9 = arith.constant 0 : index
      %c0_10 = arith.constant 0 : index
      %16 = vector.load %arg9[%c0_9, %c0_10] : memref<1x128xf32, #tpu.memory_space<vmem>>, vector<1x128xf32>
      %cst_11 = arith.constant dense<0.000000e+00> : vector<128xf32>
      %17 = vector.multi_reduction <add>, %11, %cst_11 [0] : vector<8x128xf32> to vector<128xf32>
      %18 = vector.shape_cast %17 : vector<128xf32> to vector<1x128xf32>
      %19 = arith.addf %16, %18 : vector<1x128xf32>
      %c0_12 = arith.constant 0 : index
      %c0_13 = arith.constant 0 : index
      %20 = vector.load %arg9[%c0_12, %c0_13] : memref<1x128xf32, #tpu.memory_space<vmem>>, vector<1x128xf32>
      tpu.vector_store %arg9[%c0_12, %c0_13], %19 {strides = array<i32>} : memref<1x128xf32, #tpu.memory_space<vmem>>, vector<1x128xf32>,
      %c0_14 = arith.constant 0 : index
      %c0_15 = arith.constant 0 : index
      %21 = vector.load %arg10[%c0_14, %c0_15] : memref<1x128xf32, #tpu.memory_space<vmem>>, vector<1x128xf32>
      %22 = arith.mulf %11, %11 : vector<8x128xf32>
      %cst_16 = arith.constant dense<0.000000e+00> : vector<128xf32>
      %23 = vector.multi_reduction <add>, %22, %cst_16 [0] : vector<8x128xf32> to vector<128xf32>
      %24 = vector.shape_cast %23 : vector<128xf32> to vector<1x128xf32>
      %25 = arith.addf %21, %24 : vector<1x128xf32>
      %c0_17 = arith.constant 0 : index
      %c0_18 = arith.constant 0 : index
      %26 = vector.load %arg10[%c0_17, %c0_18] : memref<1x128xf32, #tpu.memory_space<vmem>>, vector<1x128xf32>
      tpu.vector_store %arg10[%c0_17, %c0_18], %25 {strides = array<i32>} : memref<1x128xf32, #tpu.memory_space<vmem>>, vector<1x128xf32>,
    } else {
    }
    %c1_i32 = arith.constant 1 : i32
    %3 = arith.cmpi eq, %arg0, %c1_i32 : i32
    %4 = arith.extui %3 : i1 to i32
    %c0_i32_1 = arith.constant 0 : i32
    %5 = arith.cmpi ne, %4, %c0_i32_1 : i32
    scf.if %5 {
      %c0_i32_2 = arith.constant 0 : i32
      %6 = arith.cmpi eq, %arg1, %c0_i32_2 : i32
      %7 = arith.extui %6 : i1 to i32
      %c0_i32_3 = arith.constant 0 : i32
      %8 = arith.cmpi ne, %7, %c0_i32_3 : i32
      scf.if %8 {
        %cst_18 = arith.constant 1.000000e+00 : f32
        %cst_19 = arith.constant 8.000000e+00 : f32
        %35 = arith.divf %cst_18, %cst_19 : f32
        %c0_20 = arith.constant 0 : index
        %c0_21 = arith.constant 0 : index
        %36 = vector.load %arg9[%c0_20, %c0_21] : memref<1x128xf32, #tpu.memory_space<vmem>>, vector<1x128xf32>
        %37 = vector.broadcast %35 : f32 to vector<1x128xf32>
        %38 = arith.mulf %36, %37 : vector<1x128xf32>
        %c0_22 = arith.constant 0 : index
        %c0_23 = arith.constant 0 : index
        %39 = vector.load %arg10[%c0_22, %c0_23] : memref<1x128xf32, #tpu.memory_space<vmem>>, vector<1x128xf32>
        %40 = vector.broadcast %35 : f32 to vector<1x128xf32>
        %41 = arith.mulf %39, %40 : vector<1x128xf32>
        %42 = arith.mulf %38, %38 : vector<1x128xf32>
        %43 = arith.subf %41, %42 : vector<1x128xf32>
        %cst_24 = arith.constant 0.000000e+00 : f32
        %44 = vector.broadcast %cst_24 : f32 to vector<1x128xf32>
        %45 = arith.maximumf %43, %44 : vector<1x128xf32>
        %c0_25 = arith.constant 0 : index
        %c0_26 = arith.constant 0 : index
        %46 = vector.load %arg4[%c0_25, %c0_26] : memref<1x128xf32, #tpu.memory_space<vmem>>, vector<1x128xf32>
        %cst_27 = arith.constant 9.99999974E-6 : f32
        %47 = vector.broadcast %cst_27 : f32 to vector<1x128xf32>
        %48 = arith.addf %45, %47 : vector<1x128xf32>
        %49 = math.rsqrt %48 : vector<1x128xf32>
        %50 = arith.mulf %46, %49 : vector<1x128xf32>
        %c0_28 = arith.constant 0 : index
        %c0_29 = arith.constant 0 : index
        %51 = vector.load %arg11[%c0_28, %c0_29] : memref<1x128xf32, #tpu.memory_space<vmem>>, vector<1x128xf32>
        tpu.vector_store %arg11[%c0_28, %c0_29], %50 {strides = array<i32>} : memref<1x128xf32, #tpu.memory_space<vmem>>, vector<1x128xf32>,
        %c0_30 = arith.constant 0 : index
        %c0_31 = arith.constant 0 : index
        %52 = vector.load %arg5[%c0_30, %c0_31] : memref<1x128xf32, #tpu.memory_space<vmem>>, vector<1x128xf32>
        %53 = arith.mulf %38, %50 : vector<1x128xf32>
        %54 = arith.subf %52, %53 : vector<1x128xf32>
        %c0_32 = arith.constant 0 : index
        %c0_33 = arith.constant 0 : index
        %55 = vector.load %arg12[%c0_32, %c0_33] : memref<1x128xf32, #tpu.memory_space<vmem>>, vector<1x128xf32>
        tpu.vector_store %arg12[%c0_32, %c0_33], %54 {strides = array<i32>} : memref<1x128xf32, #tpu.memory_space<vmem>>, vector<1x128xf32>,
      } else {
      }
      %9 = arith.index_cast %arg1 : i32 to index
      %c0 = arith.constant 0 : index
      %c0_4 = arith.constant 0 : index
      %10 = vector.load %arg13[%9, %c0, %c0_4] : memref<1x8x128xf32, #tpu.memory_space<vmem>>, vector<1x8x128xf32>
      %11 = vector.shape_cast %10 : vector<1x8x128xf32> to vector<8x128xf32>
      %c0_5 = arith.constant 0 : index
      %c0_6 = arith.constant 0 : index
      %12 = vector.load %arg11[%c0_5, %c0_6] : memref<1x128xf32, #tpu.memory_space<vmem>>, vector<1x128xf32>
      %13 = vector.broadcast %12 : vector<1x128xf32> to vector<8x128xf32>
      %14 = arith.mulf %11, %13 : vector<8x128xf32>
      %c0_7 = arith.constant 0 : index
      %c0_8 = arith.constant 0 : index
      %15 = vector.load %arg12[%c0_7, %c0_8] : memref<1x128xf32, #tpu.memory_space<vmem>>, vector<1x128xf32>
      %16 = vector.broadcast %15 : vector<1x128xf32> to vector<8x128xf32>
      %17 = arith.addf %14, %16 : vector<8x128xf32>
      %cst = arith.constant 0.000000e+00 : f32
      %18 = vector.broadcast %cst : f32 to vector<8x128xf32>
      %19 = arith.maximumf %17, %18 : vector<8x128xf32>
      %20 = arith.truncf %19 : vector<8x128xf32> to vector<8x128xbf16>
      %c0_9 = arith.constant 0 : index
      %c0_10 = arith.constant 0 : index
      %21 = vector.load %arg6[%c0_9, %c0_10] : memref<128x128xbf16, #tpu.memory_space<vmem>>, vector<128x128xbf16>
      %cst_11 = arith.constant dense<0.000000e+00> : vector<8x128xf32>
      %22 = tpu.matmul %20, %21, %cst_11 {dimension_numbers = #tpu.dot_dimension_numbers<[1], [0], [0], [1], [0, 0, 1, 1], [], []>} : vector<8x128xbf16>, vector<128x128xbf16>, vector<8x128xf32> -> vector<8x128xf32>
      %c0_12 = arith.constant 0 : index
      %c0_13 = arith.constant 0 : index
      %23 = vector.load %arg7[%c0_12, %c0_13] : memref<1x128xf32, #tpu.memory_space<vmem>>, vector<1x128xf32>
      %24 = vector.broadcast %23 : vector<1x128xf32> to vector<8x128xf32>
      %25 = arith.addf %22, %24 : vector<8x128xf32>
      %26 = arith.mulf %25, %25 : vector<8x128xf32>
      %cst_14 = arith.constant dense<0.000000e+00> : vector<8xf32>
      %27 = vector.multi_reduction <add>, %26, %cst_14 [1] : vector<8x128xf32> to vector<8xf32>
      %28 = vector.shape_cast %27 : vector<8xf32> to vector<8x1xf32>
      %cst_15 = arith.constant 1.000000e-24 : f32
      %29 = vector.broadcast %cst_15 : f32 to vector<8x1xf32>
      %30 = arith.maximumf %28, %29 : vector<8x1xf32>
      %31 = math.rsqrt %30 : vector<8x1xf32>
      %32 = vector.broadcast %31 : vector<8x1xf32> to vector<8x128xf32>
      %33 = arith.mulf %25, %32 : vector<8x128xf32>
      %c0_16 = arith.constant 0 : index
      %c0_17 = arith.constant 0 : index
      %34 = vector.load %arg8[%c0_16, %c0_17] : memref<8x128xf32, #tpu.memory_space<vmem>>, vector<8x128xf32>
      tpu.vector_store %arg8[%c0_16, %c0_17], %33 {strides = array<i32>} : memref<8x128xf32, #tpu.memory_space<vmem>>, vector<8x128xf32>,
    } else {
    }
    return
  }
  func.func @transform_0(%arg0: i32, %arg1: i32) -> (i32, i32) {
    %c1_i32 = arith.constant 1 : i32
    %0 = arith.subi %c1_i32, %arg0 : i32
    %1 = arith.muli %arg1, %0 : i32
    %c0_i32 = arith.constant 0 : i32
    %c0_i32_0 = arith.constant 0 : i32
    return %1, %c0_i32 : i32, i32
  }
  func.func @transform_1(%arg0: i32, %arg1: i32) -> (i32, i32) {
    %c0_i32 = arith.constant 0 : i32
    %c0_i32_0 = arith.constant 0 : i32
    %c0_i32_1 = arith.constant 0 : i32
    return %c0_i32, %c0_i32_0 : i32, i32
  }
  func.func @transform_2(%arg0: i32, %arg1: i32) -> (i32, i32) {
    %c0_i32 = arith.constant 0 : i32
    %c0_i32_0 = arith.constant 0 : i32
    %c0_i32_1 = arith.constant 0 : i32
    return %c0_i32, %c0_i32_0 : i32, i32
  }
  func.func @transform_3(%arg0: i32, %arg1: i32) -> (i32, i32) {
    %c0_i32 = arith.constant 0 : i32
    %c0_i32_0 = arith.constant 0 : i32
    %c0_i32_1 = arith.constant 0 : i32
    return %c0_i32, %c0_i32_0 : i32, i32
  }
  func.func @transform_4(%arg0: i32, %arg1: i32) -> (i32, i32) {
    %c0_i32 = arith.constant 0 : i32
    %c0_i32_0 = arith.constant 0 : i32
    %c0_i32_1 = arith.constant 0 : i32
    return %c0_i32, %c0_i32_0 : i32, i32
  }
  func.func @transform_5(%arg0: i32, %arg1: i32) -> (i32, i32) {
    %c0_i32 = arith.constant 0 : i32
    %c0_i32_0 = arith.constant 0 : i32
    %c0_i32_1 = arith.constant 0 : i32
    return %c0_i32, %c0_i32_0 : i32, i32
  }
  func.func @transform_6(%arg0: i32, %arg1: i32) -> (i32, i32) {
    %0 = arith.muli %arg1, %arg0 : i32
    %c0_i32 = arith.constant 0 : i32
    %c0_i32_0 = arith.constant 0 : i32
    return %0, %c0_i32 : i32, i32
  }
}

</mosaic_0001>

<llo_original>
// kernel: tpu_custom_call.1
$region0: #{tpu_custom_call.1}
  #allocation0 [shape = 'u32[]', space=smem, size = 0x4, offset = 0x4, fixed_abs, tag = 'smem constant byte address 0x4 - core index']
  #allocation1 [shape = 'u32[72,128]{1,0:T(1,128)}', space=vmem, size = 0x9000, scoped, tag = 'internal scratch']
  #allocation2 [shape = 'f32[1,128]{1,0:T(1,128)}', space=vmem, size = 0x200, scoped, tag = 'scratch operand']
  #allocation3 [shape = 'f32[1,128]{1,0:T(1,128)}', space=vmem, size = 0x200, scoped, tag = 'scratch operand']
  #allocation4 [shape = 'f32[1,128]{1,0:T(1,128)}', space=vmem, size = 0x200, scoped, tag = 'scratch operand']
  #allocation5 [shape = 'f32[1,128]{1,0:T(1,128)}', space=vmem, size = 0x200, scoped, tag = 'scratch operand']
  #allocation6 [shape = 'f32[1,8,128]{2,1,0:T(8,128)}', space=vmem, size = 0x1000, scoped, tag = 'scratch operand']
  %s0 = inlined_call_operand.hbm [shape: bf16[8,128], index: 0, kind: input, shape index: {}]
  %s1 = inlined_call_operand.hbm [shape: bf16[128,128], index: 1, kind: input, shape index: {}]
  %s2 = inlined_call_operand.vmem [shape: f32[1,128], index: 2, kind: input, shape index: {}]
  %s3 = inlined_call_operand.vmem [shape: f32[1,128], index: 3, kind: input, shape index: {}]
  %s4 = inlined_call_operand.hbm [shape: bf16[128,128], index: 4, kind: input, shape index: {}]
  %s5 = inlined_call_operand.vmem [shape: f32[1,128], index: 5, kind: input, shape index: {}]
  %s6 = inlined_call_operand.hbm [shape: f32[8,128], index: 6, kind: output, shape index: {}]
  %s7 = sld [smem:[#allocation0]]
  $region85: #{tpu_custom_call.1} parent=0
    _
  %s9 = ssub.s32 1, %s7
  %s10 = scalar_select 0, %s9, %s7
  $region1: #{tpu_custom_call.1} parent=0
    #allocation7 [shape = 'u8[4096]{0}', space=vmem, size = 0x1000, scoped, tag = 'input window, operand 0']
    #allocation8 [shape = 's32[2]{0}', space=sflag, size = 0x8, scoped, tag = 'scoped memory for tpu_custom_call.1']
    #allocation9 [shape = 's32[2]{0}', space=sflag, size = 0x8, scoped, tag = 'scoped memory for tpu_custom_call.1']
    #allocation10 [shape = 'u8[32768]{0}', space=vmem, size = 0x8000, scoped, tag = 'input window, operand 1, single buffered']
    #allocation11 [shape = 's32[1]{0}', space=sflag, size = 0x4, scoped, tag = 'scoped memory for tpu_custom_call.1']
    #allocation12 [shape = 'u8[32768]{0}', space=vmem, size = 0x8000, scoped, tag = 'input window, operand 4, single buffered']
    #allocation13 [shape = 'u8[8192]{0}', space=vmem, size = 0x2000, scoped, tag = 'output window, operand 0']
    %11 = vsyncpa [#allocation8], 0
    %s12 = scalar_lea.sflag [#allocation8], 1
    %13 = vsyncpa %s12, 0
    %14 = vsyncpa [#allocation11], 0
    %15 = vsyncpa [#allocation9], 0
    %s16 = scalar_lea.sflag [#allocation9], 1
    %17 = vsyncpa %s16, 0
    loop: start=0, step=1, limit=4
    $region2: #{tpu_custom_call.1} parent=1 // loop_pre_header
      _
    $region3: #{tpu_custom_call.1} parent=1 // loop_header
      %s19 = sphi 0, %s23
      %p20 = scmp.ge.s32.totalorder %s19, 4
      %s26 = sphi 0, %s38
      %s27 = sphi 0, %s34
      %s28 = sphi 0, %s26
      %s29 = sphi 0, %s27
      %s30 = sphi 0, %s28
      %s31 = sphi 0, %s29
      %s45 = sphi 0, %s47
      %s48 = sphi 0, %s45
      %s49 = sphi 0, %s48
      %s65 = sphi 0, %s49
      %s69 = sphi 0, %s69
      %s71 = sphi 0, %s69
      %s72 = sphi 0, %s71
      %s86 = sphi 0, %s72
      %s90 = sphi 0, %s90
      %s92 = sphi 0, %s90
      %s93 = sphi 0, %s92
      %s107 = sphi 0, %s93
      %s111 = sphi 0, %s111
      %s113 = sphi 0, %s111
      %s114 = sphi 0, %s113
      %s128 = sphi 0, %s114
      %s132 = sphi 0, %s132
      %s134 = sphi 0, %s132
      %s135 = sphi 0, %s134
      %s149 = sphi 0, %s135
      %s153 = sphi 0, %s153
      %s155 = sphi 0, %s153
      %s156 = sphi 0, %s155
      %s170 = sphi 0, %s156
      %s178 = sphi 0, %s180
      %s181 = sphi 0, %s178
      %s182 = sphi 0, %s181
      %s198 = sphi 0, %s182
    $region4: #{tpu_custom_call.1} parent=1 // loop_header_branch
      %22 = sbr.rel (%p20) target = $region8
    $region5: #{tpu_custom_call.1} parent=1 // loop_body
      %s24 = ssub.s32 %s19, 1
      %s25 = ssub.s32 %s19, 2
      %s32 = sadd.s32 1, %s27
      %p33 = scmp.ge.s32.totalorder %s32, 1
      %s34 = scalar_select %p33, 0, %s32
      %s35 = sadd.s32 1, %s26
      %s36 = scalar_select %p33, %s35, %s26
      %p37 = scmp.ge.s32.totalorder %s36, 2
      %s38 = scalar_select %p37, 0, %s36
      %s39 = ssub.s32 1, %s26
      %s40 = smul.u32 %s27, %s39
      %s41 = ssub.s32 1, %s38
      %s42 = smul.u32 %s34, %s41
      %s43 = ssub.s32 %s40, %s42
      %p44 = scmp.eq.s32.totalorder %s43, 0
      %s46 = sadd.s32 %s45, 1
      %s47 = scalar_select %p44, %s45, %s46
      %p50 = pneg %p44
      %p51 = scmp.eq.s32.totalorder %s19, 1
      %p52 = por %p50, %p51
      %p53 = scmp.ne.s32.totalorder %s45, %s48
      %p54 = scmp.eq.s32.totalorder %s19, 0
      %p55 = por %p53, %p54
      %p56 = scmp.ne.s32.totalorder %s45, %s48
      %p57 = scmp.eq.s32.totalorder %s24, 1
      %p58 = por %p56, %p57
      %p59 = scmp.ne.s32.totalorder %s48, %s49
      %p60 = scmp.eq.s32.totalorder %s24, 0
      %p61 = por %p59, %p60
      %p62 = scmp.ne.s32.totalorder %s48, %s49
      %p63 = scmp.eq.s32.totalorder %s25, 1
      %p64 = por %p62, %p63
      %p66 = scmp.ne.s32.totalorder %s49, %s65
      %p67 = scmp.eq.s32.totalorder %s25, 0
      %p68 = por %p66, %p67
      %s70 = sadd.s32 %s69, 1
      %p73 = scmp.eq.s32.totalorder %s19, 1
      %p74 = scmp.ne.s32.totalorder %s69, %s71
      %p75 = scmp.eq.s32.totalorder %s19, 0
      %p76 = por %p74, %p75
      %p77 = scmp.ne.s32.totalorder %s69, %s71
      %p78 = scmp.eq.s32.totalorder %s24, 1
      %p79 = por %p77, %p78
      %p80 = scmp.ne.s32.totalorder %s71, %s72
      %p81 = scmp.eq.s32.totalorder %s24, 0
      %p82 = por %p80, %p81
      %p83 = scmp.ne.s32.totalorder %s71, %s72
      %p84 = scmp.eq.s32.totalorder %s25, 1
      %p85 = por %p83, %p84
      %p87 = scmp.ne.s32.totalorder %s72, %s86
      %p88 = scmp.eq.s32.totalorder %s25, 0
      %p89 = por %p87, %p88
      %s91 = sadd.s32 %s90, 1
      %p94 = scmp.eq.s32.totalorder %s19, 1
      %p95 = scmp.ne.s32.totalorder %s90, %s92
      %p96 = scmp.eq.s32.totalorder %s19, 0
      %p97 = por %p95, %p96
      %p98 = scmp.ne.s32.totalorder %s90, %s92
      %p99 = scmp.eq.s32.totalorder %s24, 1
      %p100 = por %p98, %p99
      %p101 = scmp.ne.s32.totalorder %s92, %s93
      %p102 = scmp.eq.s32.totalorder %s24, 0
      %p103 = por %p101, %p102
      %p104 = scmp.ne.s32.totalorder %s92, %s93
      %p105 = scmp.eq.s32.totalorder %s25, 1
      %p106 = por %p104, %p105
      %p108 = scmp.ne.s32.totalorder %s93, %s107
      %p109 = scmp.eq.s32.totalorder %s25, 0
      %p110 = por %p108, %p109
      %s112 = sadd.s32 %s111, 1
      %p115 = scmp.eq.s32.totalorder %s19, 1
      %p116 = scmp.ne.s32.totalorder %s111, %s113
      %p117 = scmp.eq.s32.totalorder %s19, 0
      %p118 = por %p116, %p117
      %p119 = scmp.ne.s32.totalorder %s111, %s113
      %p120 = scmp.eq.s32.totalorder %s24, 1
      %p121 = por %p119, %p120
      %p122 = scmp.ne.s32.totalorder %s113, %s114
      %p123 = scmp.eq.s32.totalorder %s24, 0
      %p124 = por %p122, %p123
      %p125 = scmp.ne.s32.totalorder %s113, %s114
      %p126 = scmp.eq.s32.totalorder %s25, 1
      %p127 = por %p125, %p126
      %p129 = scmp.ne.s32.totalorder %s114, %s128
      %p130 = scmp.eq.s32.totalorder %s25, 0
      %p131 = por %p129, %p130
      %s133 = sadd.s32 %s132, 1
      %p136 = scmp.eq.s32.totalorder %s19, 1
      %p137 = scmp.ne.s32.totalorder %s132, %s134
      %p138 = scmp.eq.s32.totalorder %s19, 0
      %p139 = por %p137, %p138
      %p140 = scmp.ne.s32.totalorder %s132, %s134
      %p141 = scmp.eq.s32.totalorder %s24, 1
      %p142 = por %p140, %p141
      %p143 = scmp.ne.s32.totalorder %s134, %s135
      %p144 = scmp.eq.s32.totalorder %s24, 0
      %p145 = por %p143, %p144
      %p146 = scmp.ne.s32.totalorder %s134, %s135
      %p147 = scmp.eq.s32.totalorder %s25, 1
      %p148 = por %p146, %p147
      %p150 = scmp.ne.s32.totalorder %s135, %s149
      %p151 = scmp.eq.s32.totalorder %s25, 0
      %p152 = por %p150, %p151
      %s154 = sadd.s32 %s153, 1
      %p157 = scmp.eq.s32.totalorder %s19, 1
      %p158 = scmp.ne.s32.totalorder %s153, %s155
      %p159 = scmp.eq.s32.totalorder %s19, 0
      %p160 = por %p158, %p159
      %p161 = scmp.ne.s32.totalorder %s153, %s155
      %p162 = scmp.eq.s32.totalorder %s24, 1
      %p163 = por %p161, %p162
      %p164 = scmp.ne.s32.totalorder %s155, %s156
      %p165 = scmp.eq.s32.totalorder %s24, 0
      %p166 = por %p164, %p165
      %p167 = scmp.ne.s32.totalorder %s155, %s156
      %p168 = scmp.eq.s32.totalorder %s25, 1
      %p169 = por %p167, %p168
      %p171 = scmp.ne.s32.totalorder %s156, %s170
      %p172 = scmp.eq.s32.totalorder %s25, 0
      %p173 = por %p171, %p172
      %s174 = smul.u32 %s27, %s26
      %s175 = smul.u32 %s34, %s38
      %s176 = ssub.s32 %s174, %s175
      %p177 = scmp.eq.s32.totalorder %s176, 0
      %s179 = sadd.s32 %s178, 1
      %s180 = scalar_select %p177, %s178, %s179
      %p183 = pneg %p177
      %p184 = scmp.eq.s32.totalorder %s19, 1
      %p185 = por %p183, %p184
      %p186 = scmp.ne.s32.totalorder %s178, %s181
      %p187 = scmp.eq.s32.totalorder %s19, 0
      %p188 = por %p186, %p187
      %p189 = scmp.ne.s32.totalorder %s178, %s181
      %p190 = scmp.eq.s32.totalorder %s24, 1
      %p191 = por %p189, %p190
      %p192 = scmp.ne.s32.totalorder %s181, %s182
      %p193 = scmp.eq.s32.totalorder %s24, 0
      %p194 = por %p192, %p193
      %p195 = scmp.ne.s32.totalorder %s181, %s182
      %p196 = scmp.eq.s32.totalorder %s25, 1
      %p197 = por %p195, %p196
      %p199 = scmp.ne.s32.totalorder %s182, %s198
      %p200 = scmp.eq.s32.totalorder %s25, 0
      %p201 = por %p199, %p200
      %p202 = scmp.le.s32.totalorder 1, %s19
      %p203 = scmp.lt.s32.totalorder %s19, 3
      %p204 = pnand %p202, %p203
      %p205 = pneg %p204
      // Predicated region
      $region9: #{tpu_custom_call.1} parent=5 // pred_check
        _
      $region10: #{tpu_custom_call.1} parent=5 // pred_check_branch
        %207 = sbr.rel (%p204) target = $region12
      $region11: #{tpu_custom_call.1} parent=5 // pred_region
        %s208 = ssub.s32 %s19, 1
        // Predicated region
        $region13: #{tpu_custom_call.1} parent=11 // pred_check
          %p209 = pneg %p82
        $region14: #{tpu_custom_call.1} parent=11 // pred_check_branch
          %211 = sbr.rel (%p209) target = $region16
        $region15: #{tpu_custom_call.1} parent=11 // pred_region
          %213 = vsyncadd [#allocation11], 0
          %s214 = sshll.u32 %s1, 4
          %s215 = int_to_ptr.hbm [resolvable:$true] %s214
          %s216 = sshll.u32 [#allocation10], 4
          %s217 = int_to_ptr.vmem [resolvable:$true] %s216
          %222 = dma.hbm_to_vmem [thread:$0]  %s215, 1024, %s217, [#allocation11], 64, 64, 4
        $region16: #{tpu_custom_call.1} parent=11 // pred_fallthru
          _
        // Predicated region
        $region17: #{tpu_custom_call.1} parent=11 // pred_check
          %p223 = pneg %p103
        $region18: #{tpu_custom_call.1} parent=11 // pred_check_branch
          %225 = sbr.rel (%p223) target = $region20
        $region19: #{tpu_custom_call.1} parent=11 // pred_region
          _
        $region20: #{tpu_custom_call.1} parent=11 // pred_fallthru
          _
        // Predicated region
        $region21: #{tpu_custom_call.1} parent=11 // pred_check
          %p226 = pneg %p124
        $region22: #{tpu_custom_call.1} parent=11 // pred_check_branch
          %228 = sbr.rel (%p226) target = $region24
        $region23: #{tpu_custom_call.1} parent=11 // pred_region
          _
        $region24: #{tpu_custom_call.1} parent=11 // pred_fallthru
          _
        // Predicated region
        $region25: #{tpu_custom_call.1} parent=11 // pred_check
          %p229 = pneg %p145
        $region26: #{tpu_custom_call.1} parent=11 // pred_check_branch
          %231 = sbr.rel (%p229) target = $region28
        $region27: #{tpu_custom_call.1} parent=11 // pred_region
          %233 = vsyncadd [#allocation11], 0
          %s234 = sshll.u32 %s4, 4
          %s235 = int_to_ptr.hbm [resolvable:$true] %s234
          %s236 = sshll.u32 [#allocation12], 4
          %s237 = int_to_ptr.vmem [resolvable:$true] %s236
          %242 = dma.hbm_to_vmem [thread:$0]  %s235, 1024, %s237, [#allocation11], 64, 64, 4
        $region28: #{tpu_custom_call.1} parent=11 // pred_fallthru
          _
        // Predicated region
        $region29: #{tpu_custom_call.1} parent=11 // pred_check
          %p243 = pneg %p166
        $region30: #{tpu_custom_call.1} parent=11 // pred_check_branch
          %245 = sbr.rel (%p243) target = $region32
        $region31: #{tpu_custom_call.1} parent=11 // pred_region
          _
        $region32: #{tpu_custom_call.1} parent=11 // pred_fallthru
          _
      $region12: #{tpu_custom_call.1} parent=5 // pred_fallthru
        _
      %p246 = scmp.lt.s32.totalorder %s19, 2
      // Predicated region
      $region33: #{tpu_custom_call.1} parent=5 // pred_check
        %p247 = pneg %p246
      $region34: #{tpu_custom_call.1} parent=5 // pred_check_branch
        %249 = sbr.rel (%p247) target = $region36
      $region35: #{tpu_custom_call.1} parent=5 // pred_region
        // Predicated region
        $region37: #{tpu_custom_call.1} parent=35 // pred_check
          %p250 = pneg %p55
        $region38: #{tpu_custom_call.1} parent=35 // pred_check_branch
          %252 = sbr.rel (%p250) target = $region40
        $region39: #{tpu_custom_call.1} parent=35 // pred_region
          %s253 = sand.u32 %s45, 1
          %s254 = scalar_lea.sflag [#allocation8], %s253
          %s255 = sand.u32 %s45, 1
          %s256 = smul.addr %s255, 4
          %s257 = scalar_lea.vmem [#allocation7], %s256
          %s258 = ssub.s32 1, %s26
          %s259 = smul.u32 %s27, %s258
          %261 = vsyncadd %s254, 0
          %s262 = smul.addr %s259, 4
          %s263 = scalar_lea.hbm %s0, %s262
          %s265 = sshll.u32 %s263, 4
          %s266 = int_to_ptr.hbm [resolvable:$true] %s265
          %s267 = sshll.u32 %s257, 4
          %s268 = int_to_ptr.vmem [resolvable:$true] %s267
          %270 = dma.hbm_to_vmem [thread:$0]  %s266, 64, %s268, %s254
        $region40: #{tpu_custom_call.1} parent=35 // pred_fallthru
          _
      $region36: #{tpu_custom_call.1} parent=5 // pred_fallthru
        _
      %p271 = scmp.le.s32.totalorder 1, %s19
      %p272 = scmp.lt.s32.totalorder %s19, 3
      %p273 = pnand %p271, %p272
      %p274 = pneg %p273
      // Predicated region
      $region41: #{tpu_custom_call.1} parent=5 // pred_check
        _
      $region42: #{tpu_custom_call.1} parent=5 // pred_check_branch
        %276 = sbr.rel (%p273) target = $region44
      $region43: #{tpu_custom_call.1} parent=5 // pred_region
        %s277 = ssub.s32 %s19, 1
        %s278 = sand.u32 %s48, 1
        %s279 = scalar_lea.sflag [#allocation8], %s278
        %s280 = sand.u32 %s48, 1
        %s281 = smul.addr %s280, 4
        %s282 = scalar_lea.vmem [#allocation7], %s281
        // Predicated region
        $region45: #{tpu_custom_call.1} parent=43 // pred_check
          %p283 = pneg %p61
        $region46: #{tpu_custom_call.1} parent=43 // pred_check_branch
          %285 = sbr.rel (%p283) target = $region48
        $region47: #{tpu_custom_call.1} parent=43 // pred_region
          %287 = dma.done %s279, 64
        $region48: #{tpu_custom_call.1} parent=43 // pred_fallthru
          _
        // Predicated region
        $region49: #{tpu_custom_call.1} parent=43 // pred_check
          %p288 = pneg %p82
        $region50: #{tpu_custom_call.1} parent=43 // pred_check_branch
          %290 = sbr.rel (%p288) target = $region52
        $region51: #{tpu_custom_call.1} parent=43 // pred_region
          %292 = dma.done [#allocation11], 1024
        $region52: #{tpu_custom_call.1} parent=43 // pred_fallthru
          _
        // Predicated region
        $region53: #{tpu_custom_call.1} parent=43 // pred_check
          %p293 = pneg %p145
        $region54: #{tpu_custom_call.1} parent=43 // pred_check_branch
          %295 = sbr.rel (%p293) target = $region56
        $region55: #{tpu_custom_call.1} parent=43 // pred_region
          %297 = dma.done [#allocation11], 1024
        $region56: #{tpu_custom_call.1} parent=43 // pred_fallthru
          _
        %s298 = sand.u32 %s48, 1
        %s299 = scalar_lea.sflag [#allocation8], %s298
        %s300 = sand.u32 %s48, 1
        %s301 = smul.addr %s300, 4
        %s302 = scalar_lea.vmem [#allocation7], %s301
        %p303 = pneg %p61
        %p304 = pneg %p58
        %p305 = pneg %p82
        %p306 = pneg %p79
        %p307 = pneg %p103
        %p308 = pneg %p100
        %p309 = pneg %p124
        %p310 = pneg %p121
        %p311 = pneg %p145
        %p312 = pneg %p142
        %p313 = pneg %p166
        %p314 = pneg %p163
        %p315 = pneg %p194
        %p316 = pneg %p191
        %s317 = sand.u32 %s181, 1
        %s318 = scalar_lea.sflag [#allocation9], %s317
        %s319 = sand.u32 %s181, 1
        %s320 = smul.addr %s319, 8
        %s321 = scalar_lea.vmem [#allocation13], %s320
        %s322 = ssub.s32 1, %s28
        %s323 = smul.u32 %s29, %s322
        %s324 = smul.u32 %s29, %s28
        %p325 = scmp.eq.s32.totalorder %s28, 0
        // Predicated region
        $region57: #{tpu_custom_call.1} parent=43 // pred_check
          %p326 = pneg %p325
        $region58: #{tpu_custom_call.1} parent=43 // pred_check_branch
          %328 = sbr.rel (%p326) target = $region60
        $region59: #{tpu_custom_call.1} parent=43 // pred_region
          %p329 = scmp.eq.s32.totalorder %s29, 0
          // Predicated region
          $region61: #{tpu_custom_call.1} parent=59 // pred_check
            %p330 = pneg %p329
          $region62: #{tpu_custom_call.1} parent=59 // pred_check_branch
            %332 = sbr.rel (%p330) target = $region64
          $region63: #{tpu_custom_call.1} parent=59 // pred_region
            %333 = vst [vmem:[#allocation2] sm:$0x1] 0.0
            %334 = vst [vmem:[#allocation3] sm:$0x1] 0.0
          $region64: #{tpu_custom_call.1} parent=59 // pred_fallthru
            _
          %v335 = vld [vmem:[%s282] sm:$0xf]
          %v336 = vld [vmem:[#allocation10] sm:$0xf]
          %v337 = vld [vmem:[#allocation10 + $0x4] sm:$0xf]
          %v338 = vld [vmem:[#allocation10 + $0x8] sm:$0xf]
          %v339 = vld [vmem:[#allocation10 + $0xc] sm:$0xf]
          %v340 = vld [vmem:[#allocation10 + $0x10] sm:$0xf]
          %v341 = vld [vmem:[#allocation10 + $0x14] sm:$0xf]
          %v342 = vld [vmem:[#allocation10 + $0x18] sm:$0xf]
          %v343 = vld [vmem:[#allocation10 + $0x1c] sm:$0xf]
          %v344 = vld [vmem:[#allocation10 + $0x20] sm:$0xf]
          %v345 = vld [vmem:[#allocation10 + $0x24] sm:$0xf]
          %v346 = vld [vmem:[#allocation10 + $0x28] sm:$0xf]
          %v347 = vld [vmem:[#allocation10 + $0x2c] sm:$0xf]
          %v348 = vld [vmem:[#allocation10 + $0x30] sm:$0xf]
          %v349 = vld [vmem:[#allocation10 + $0x34] sm:$0xf]
          %v350 = vld [vmem:[#allocation10 + $0x38] sm:$0xf]
          %v351 = vld [vmem:[#allocation10 + $0x3c] sm:$0xf]
          %v368 = vunpack.c.l.b16 %v336
          %v369 = vunpack.c.l.b16 %v337
          %v370 = vunpack.c.l.b16 %v338
          %v371 = vunpack.c.l.b16 %v339
          %v372 = vunpack.c.l.b16 %v340
          %v373 = vunpack.c.l.b16 %v341
          %v374 = vunpack.c.l.b16 %v342
          %v375 = vunpack.c.l.b16 %v343
          %v376 = vunpack.c.l.b16 %v344
          %v377 = vunpack.c.l.b16 %v345
          %v378 = vunpack.c.l.b16 %v346
          %v379 = vunpack.c.l.b16 %v347
          %v380 = vunpack.c.l.b16 %v348
          %v381 = vunpack.c.l.b16 %v349
          %v382 = vunpack.c.l.b16 %v350
          %v383 = vunpack.c.l.b16 %v351
          %v384 = vpack.c.b16 %v369, %v368
          %v385 = vpack.c.b16 %v371, %v370
          %v386 = vpack.c.b16 %v373, %v372
          %v387 = vpack.c.b16 %v375, %v374
          %v388 = vpack.c.b16 %v377, %v376
          %v389 = vpack.c.b16 %v379, %v378
          %v390 = vpack.c.b16 %v381, %v380
          %v391 = vpack.c.b16 %v383, %v382
          %400 = vmatpush.bf16.msra.mxu0 %v391
          %401 = vmatpush.bf16.msra.mxu0 %v390
          %402 = vmatpush.bf16.msra.mxu0 %v389
          %403 = vmatpush.bf16.msra.mxu0 %v388
          %404 = vmatpush.bf16.msra.mxu0 %v387
          %405 = vmatpush.bf16.msra.mxu0 %v386
          %406 = vmatpush.bf16.msra.mxu0 %v385
          %407 = vmatpush.bf16.msra.mxu0 %v384
          %408 = vmatmul.bf16.gmra.mxu0 %v335
          %v409 = vpop.f32.mrf.mxu0
          %v410 = vadd.f32 0.0, %v409
          %v411 = vpop.f32.mrf.mxu0
          %412 = vdwg.mxu0
          %s413 = smul.u32 %s29, 8
          %s414 = scalar_lea.vmem [#allocation6], %s413
          %415 = vst [vmem:[%s414] sm:$0xff] %v410
          %v416 = vld [vmem:[#allocation2] sm:$0x1]
          %v417 = vrot.slane %v410, 4
          %v418 = vadd.f32 %v410, %v417
          %v419 = vrot.slane %v418, 2
          %v420 = vadd.f32 %v418, %v419
          %v421 = vrot.slane %v420, 1
          %v422 = vadd.f32 %v420, %v421
          %v423 = vadd.f32 %v416, %v422
          %424 = vst [vmem:[#allocation2] sm:$0x1] %v423
          %v425 = vld [vmem:[#allocation3] sm:$0x1]
          %v426 = vmul.f32 %v410, %v410
          %v427 = vrot.slane %v426, 4
          %v428 = vadd.f32 %v426, %v427
          %v429 = vrot.slane %v428, 2
          %v430 = vadd.f32 %v428, %v429
          %v431 = vrot.slane %v430, 1
          %v432 = vadd.f32 %v430, %v431
          %v433 = vadd.f32 %v425, %v432
          %434 = vst [vmem:[#allocation3] sm:$0x1] %v433
        $region60: #{tpu_custom_call.1} parent=43 // pred_fallthru
          _
        %p435 = scmp.eq.s32.totalorder %s28, 1
        // Predicated region
        $region65: #{tpu_custom_call.1} parent=43 // pred_check
          %p436 = pneg %p435
        $region66: #{tpu_custom_call.1} parent=43 // pred_check_branch
          %438 = sbr.rel (%p436) target = $region68
        $region67: #{tpu_custom_call.1} parent=43 // pred_region
          %p439 = scmp.eq.s32.totalorder %s29, 0
          // Predicated region
          $region69: #{tpu_custom_call.1} parent=67 // pred_check
            %p440 = pneg %p439
          $region70: #{tpu_custom_call.1} parent=67 // pred_check_branch
            %442 = sbr.rel (%p440) target = $region72
          $region71: #{tpu_custom_call.1} parent=67 // pred_region
            %v443 = vld [vmem:[#allocation2] sm:$0x1]
            %v444 = vmul.f32 %v443, 0.125
            %v445 = vld [vmem:[#allocation3] sm:$0x1]
            %v446 = vmul.f32 %v445, 0.125
            %v447 = vmul.f32 %v444, %v444
            %v448 = vsub.f32 %v446, %v447
            %v449 = vmax.f32 %v448, 0.0
            %v450 = vld [vmem:[%s2] sm:$0x1]
            %v451 = vadd.f32 %v449, 1e-05
            %v452 = vrsqrt.pop %v451
            %v453 = vmul.f32 %v452, %v451
            %v454 = vmul.f32 %v453, %v452
            %v455 = vmul.f32 0.5, %v454
            %v456 = vsub.f32 1.5, %v455
            %v457 = vmul.f32 %v452, %v456
            %vm458 = vweird.f32 %v451
            %vm459 = vweird.f32 %v452
            %vm460 = vmor %vm458, %vm459
            %v461 = vsel %vm460, %v452, %v457
            %v462 = vmul.f32 %v450, %v461
            %463 = vst [vmem:[#allocation4] sm:$0x1] %v462
            %v464 = vld [vmem:[%s3] sm:$0x1]
            %v465 = vmul.f32 %v444, %v462
            %v466 = vsub.f32 %v464, %v465
            %467 = vst [vmem:[#allocation5] sm:$0x1] %v466
          $region72: #{tpu_custom_call.1} parent=67 // pred_fallthru
            _
          %s468 = smul.u32 %s29, 8
          %s469 = scalar_lea.vmem [#allocation6], %s468
          %v470 = vld [vmem:[%s469] sm:$0xff]
          %v471 = vld [vmem:[#allocation4] sm:$0x1]
          %v473 = vperm.slane %v471, 0
          %v475 = vmul.f32 %v470, %v473
          %v476 = vld [vmem:[#allocation5] sm:$0x1]
          %v478 = vperm.slane %v476, 0
          %v480 = vadd.f32 %v475, %v478
          %v481 = vmax.f32 %v480, 0.0
          %v482 = vpack.c.bf16 %v481, %v481
          %v483 = vld [vmem:[#allocation12] sm:$0xf]
          %v484 = vld [vmem:[#allocation12 + $0x4] sm:$0xf]
          %v485 = vld [vmem:[#allocation12 + $0x8] sm:$0xf]
          %v486 = vld [vmem:[#allocation12 + $0xc] sm:$0xf]
          %v487 = vld [vmem:[#allocation12 + $0x10] sm:$0xf]
          %v488 = vld [vmem:[#allocation12 + $0x14] sm:$0xf]
          %v489 = vld [vmem:[#allocation12 + $0x18] sm:$0xf]
          %v490 = vld [vmem:[#allocation12 + $0x1c] sm:$0xf]
          %v491 = vld [vmem:[#allocation12 + $0x20] sm:$0xf]
          %v492 = vld [vmem:[#allocation12 + $0x24] sm:$0xf]
          %v493 = vld [vmem:[#allocation12 + $0x28] sm:$0xf]
          %v494 = vld [vmem:[#allocation12 + $0x2c] sm:$0xf]
          %v495 = vld [vmem:[#allocation12 + $0x30] sm:$0xf]
          %v496 = vld [vmem:[#allocation12 + $0x34] sm:$0xf]
          %v497 = vld [vmem:[#allocation12 + $0x38] sm:$0xf]
          %v498 = vld [vmem:[#allocation12 + $0x3c] sm:$0xf]
          %v499 = vld [vmem:[%s5] sm:$0x1]
          %v501 = vperm.slane %v499, 0
          %v519 = vunpack.c.l.b16 %v483
          %v520 = vunpack.c.l.b16 %v484
          %v521 = vunpack.c.l.b16 %v485
          %v522 = vunpack.c.l.b16 %v486
          %v523 = vunpack.c.l.b16 %v487
          %v524 = vunpack.c.l.b16 %v488
          %v525 = vunpack.c.l.b16 %v489
          %v526 = vunpack.c.l.b16 %v490
          %v527 = vunpack.c.l.b16 %v491
          %v528 = vunpack.c.l.b16 %v492
          %v529 = vunpack.c.l.b16 %v493
          %v530 = vunpack.c.l.b16 %v494
          %v531 = vunpack.c.l.b16 %v495
          %v532 = vunpack.c.l.b16 %v496
          %v533 = vunpack.c.l.b16 %v497
          %v534 = vunpack.c.l.b16 %v498
          %v535 = vpack.c.b16 %v520, %v519
          %v536 = vpack.c.b16 %v522, %v521
          %v537 = vpack.c.b16 %v524, %v523
          %v538 = vpack.c.b16 %v526, %v525
          %v539 = vpack.c.b16 %v528, %v527
          %v540 = vpack.c.b16 %v530, %v529
          %v541 = vpack.c.b16 %v532, %v531
          %v542 = vpack.c.b16 %v534, %v533
          %551 = vmatpush.bf16.msra.mxu0 %v542
          %552 = vmatpush.bf16.msra.mxu0 %v541
          %553 = vmatpush.bf16.msra.mxu0 %v540
          %554 = vmatpush.bf16.msra.mxu0 %v539
          %555 = vmatpush.bf16.msra.mxu0 %v538
          %556 = vmatpush.bf16.msra.mxu0 %v537
          %557 = vmatpush.bf16.msra.mxu0 %v536
          %558 = vmatpush.bf16.msra.mxu0 %v535
          %559 = vmatmul.bf16.gmra.mxu0 %v482
          %v560 = vpop.f32.mrf.mxu0
          %v561 = vadd.f32 %v501, %v560
          %v562 = vpop.f32.mrf.mxu0
          %563 = vdwg.mxu0
          %v564 = vmul.f32 %v561, %v561
          %565 = vadd.xlane.f32.xlu0 %v564
          %v566 = vpop.xlane.xlu0 %565
          %v567 = vmax.f32 %v566, 1e-24
          %v568 = vrsqrt.pop %v567
          %v569 = vmul.f32 %v568, %v567
          %v570 = vmul.f32 %v569, %v568
          %v571 = vmul.f32 0.5, %v570
          %v572 = vsub.f32 1.5, %v571
          %v573 = vmul.f32 %v568, %v572
          %vm574 = vweird.f32 %v567
          %vm575 = vweird.f32 %v568
          %vm576 = vmor %vm574, %vm575
          %v577 = vsel %vm576, %v568, %v573
          %v578 = vmul.f32 %v561, %v577
          %579 = vst [vmem:[%s321] sm:$0xff] %v578
        $region68: #{tpu_custom_call.1} parent=43 // pred_fallthru
          _
        %s580 = sand.u32 %s181, 1
        %s581 = scalar_lea.sflag [#allocation9], %s580
        %s582 = sand.u32 %s181, 1
        %s583 = smul.addr %s582, 8
        %s584 = scalar_lea.vmem [#allocation13], %s583
        // Predicated region
        $region73: #{tpu_custom_call.1} parent=43 // pred_check
          %p585 = pneg %p191
        $region74: #{tpu_custom_call.1} parent=43 // pred_check_branch
          %587 = sbr.rel (%p585) target = $region76
        $region75: #{tpu_custom_call.1} parent=43 // pred_region
          %s588 = smul.u32 %s29, %s28
          %590 = vsyncadd %s581, 0
          %s591 = smul.addr %s588, 8
          %s592 = scalar_lea.hbm %s6, %s591
          %s594 = sshll.u32 %s584, 4
          %s595 = int_to_ptr.vmem [resolvable:$true] %s594
          %s596 = sshll.u32 %s592, 4
          %s597 = int_to_ptr.hbm [resolvable:$true] %s596
          %599 = dma.vmem_to_hbm [thread:$0]  %s595, 128, %s597, %s581
        $region76: #{tpu_custom_call.1} parent=43 // pred_fallthru
          _
      $region44: #{tpu_custom_call.1} parent=5 // pred_fallthru
        _
      %p600 = scmp.le.s32.totalorder 2, %s19
      // Predicated region
      $region77: #{tpu_custom_call.1} parent=5 // pred_check
        %p601 = pneg %p600
      $region78: #{tpu_custom_call.1} parent=5 // pred_check_branch
        %603 = sbr.rel (%p601) target = $region80
      $region79: #{tpu_custom_call.1} parent=5 // pred_region
        %s604 = ssub.s32 %s19, 2
        // Predicated region
        $region81: #{tpu_custom_call.1} parent=79 // pred_check
          %p605 = pneg %p197
        $region82: #{tpu_custom_call.1} parent=79 // pred_check_branch
          %607 = sbr.rel (%p605) target = $region84
        $region83: #{tpu_custom_call.1} parent=79 // pred_region
          %s608 = sand.u32 %s182, 1
          %s609 = scalar_lea.sflag [#allocation9], %s608
          %s610 = sand.u32 %s182, 1
          %s611 = smul.addr %s610, 8
          %s612 = scalar_lea.vmem [#allocation13], %s611
          %614 = dma.done %s609, 128
        $region84: #{tpu_custom_call.1} parent=79 // pred_fallthru
          _
      $region80: #{tpu_custom_call.1} parent=5 // pred_fallthru
        _
    $region6: #{tpu_custom_call.1} parent=1 // loop_footer
      %s23 = sadd.s32 1, %s19
    $region7: #{tpu_custom_call.1} parent=1 // loop_footer_branch
      %18 = sbr.rel target = $region3
    $region8: #{tpu_custom_call.1} parent=1 // loop_exit
      _
    %615 = vsyncpa [#allocation8], 1
    %s616 = scalar_lea.sflag [#allocation8], 1
    %617 = vsyncpa %s616, 1
    %618 = vsyncpa [#allocation11], 1
    %619 = vsyncpa [#allocation9], 1
    %s620 = scalar_lea.sflag [#allocation9], 1
    %621 = vsyncpa %s620, 1

// kernel: tpu_custom_call.1
$region0: #{tpu_custom_call.1}
  #allocation0 [shape = 'u32[]', space=smem, size = 0x4, offset = 0x4, fixed_abs, tag = 'smem constant byte address 0x4 - core index']
  #allocation1 [shape = 'u32[72,128]{1,0:T(1,128)}', space=vmem, size = 0x9000, scoped, tag = 'internal scratch']
  #allocation2 [shape = 'f32[1,128]{1,0:T(1,128)}', space=vmem, size = 0x200, scoped, tag = 'scratch operand']
  #allocation3 [shape = 'f32[1,128]{1,0:T(1,128)}', space=vmem, size = 0x200, scoped, tag = 'scratch operand']
  #allocation4 [shape = 'f32[1,128]{1,0:T(1,128)}', space=vmem, size = 0x200, scoped, tag = 'scratch operand']
  #allocation5 [shape = 'f32[1,128]{1,0:T(1,128)}', space=vmem, size = 0x200, scoped, tag = 'scratch operand']
  #allocation6 [shape = 'f32[1,8,128]{2,1,0:T(8,128)}', space=vmem, size = 0x1000, scoped, tag = 'scratch operand']
  %s0 = inlined_call_operand.hbm [shape: bf16[8,128], index: 0, kind: input, shape index: {}]
  %s1 = inlined_call_operand.hbm [shape: bf16[128,128], index: 1, kind: input, shape index: {}]
  %s2 = inlined_call_operand.vmem [shape: f32[1,128], index: 2, kind: input, shape index: {}]
  %s3 = inlined_call_operand.vmem [shape: f32[1,128], index: 3, kind: input, shape index: {}]
  %s4 = inlined_call_operand.hbm [shape: bf16[128,128], index: 4, kind: input, shape index: {}]
  %s5 = inlined_call_operand.vmem [shape: f32[1,128], index: 5, kind: input, shape index: {}]
  %s6 = inlined_call_operand.hbm [shape: f32[8,128], index: 6, kind: output, shape index: {}]
  %s7 = sld [smem:[#allocation0]]
  $region85: #{tpu_custom_call.1} parent=0
    _
  %s9 = ssub.s32 1, %s7
  %s10 = scalar_select 0, %s9, %s7
  $region1: #{tpu_custom_call.1} parent=0
    #allocation7 [shape = 'u8[4096]{0}', space=vmem, size = 0x1000, scoped, tag = 'input window, operand 0']
    #allocation8 [shape = 's32[2]{0}', space=sflag, size = 0x8, scoped, tag = 'scoped memory for tpu_custom_call.1']
    #allocation9 [shape = 's32[2]{0}', space=sflag, size = 0x8, scoped, tag = 'scoped memory for tpu_custom_call.1']
    #allocation10 [shape = 'u8[32768]{0}', space=vmem, size = 0x8000, scoped, tag = 'input window, operand 1, single buffered']
    #allocation11 [shape = 's32[1]{0}', space=sflag, size = 0x4, scoped, tag = 'scoped memory for tpu_custom_call.1']
    #allocation12 [shape = 'u8[32768]{0}', space=vmem, size = 0x8000, scoped, tag = 'input window, operand 4, single buffered']
    #allocation13 [shape = 'u8[8192]{0}', space=vmem, size = 0x2000, scoped, tag = 'output window, operand 0']
    %11 = vsyncpa [#allocation8], 0
    %s12 = scalar_lea.sflag [#allocation8], 1
    %13 = vsyncpa %s12, 0
    %14 = vsyncpa [#allocation11], 0
    %15 = vsyncpa [#allocation9], 0
    %s16 = scalar_lea.sflag [#allocation9], 1
    %17 = vsyncpa %s16, 0
    loop: start=0, step=1, limit=4
    $region2: #{tpu_custom_call.1} parent=1 // loop_pre_header
      _
    $region3: #{tpu_custom_call.1} parent=1 // loop_header
      %s19 = sphi 0, %s23
      %p20 = scmp.ge.s32.totalorder %s19, 4
      %s26 = sphi 0, %s38
      %s27 = sphi 0, %s34
      %s28 = sphi 0, %s26
      %s29 = sphi 0, %s27
      %s30 = sphi 0, %s28
      %s31 = sphi 0, %s29
      %s45 = sphi 0, %s47
      %s48 = sphi 0, %s45
      %s49 = sphi 0, %s48
      %s65 = sphi 0, %s49
      %s69 = sphi 0, %s69
      %s71 = sphi 0, %s69
      %s72 = sphi 0, %s71
      %s86 = sphi 0, %s72
      %s90 = sphi 0, %s90
      %s92 = sphi 0, %s90
      %s93 = sphi 0, %s92
      %s107 = sphi 0, %s93
      %s111 = sphi 0, %s111
      %s113 = sphi 0, %s111
      %s114 = sphi 0, %s113
      %s128 = sphi 0, %s114
      %s132 = sphi 0, %s132
      %s134 = sphi 0, %s132
      %s135 = sphi 0, %s134
      %s149 = sphi 0, %s135
      %s153 = sphi 0, %s153
      %s155 = sphi 0, %s153
      %s156 = sphi 0, %s155
      %s170 = sphi 0, %s156
      %s178 = sphi 0, %s180
      %s181 = sphi 0, %s178
      %s182 = sphi 0, %s181
      %s198 = sphi 0, %s182
    $region4: #{tpu_custom_call.1} parent=1 // loop_header_branch
      %22 = sbr.rel (%p20) target = $region8
    $region5: #{tpu_custom_call.1} parent=1 // loop_body
      %s24 = ssub.s32 %s19, 1
      %s25 = ssub.s32 %s19, 2
      %s32 = sadd.s32 1, %s27
      %p33 = scmp.ge.s32.totalorder %s32, 1
      %s34 = scalar_select %p33, 0, %s32
      %s35 = sadd.s32 1, %s26
      %s36 = scalar_select %p33, %s35, %s26
      %p37 = scmp.ge.s32.totalorder %s36, 2
      %s38 = scalar_select %p37, 0, %s36
      %s39 = ssub.s32 1, %s26
      %s40 = smul.u32 %s27, %s39
      %s41 = ssub.s32 1, %s38
      %s42 = smul.u32 %s34, %s41
      %s43 = ssub.s32 %s40, %s42
      %p44 = scmp.eq.s32.totalorder %s43, 0
      %s46 = sadd.s32 %s45, 1
      %s47 = scalar_select %p44, %s45, %s46
      %p50 = pneg %p44
      %p51 = scmp.eq.s32.totalorder %s19, 1
      %p52 = por %p50, %p51
      %p53 = scmp.ne.s32.totalorder %s45, %s48
      %p54 = scmp.eq.s32.totalorder %s19, 0
      %p55 = por %p53, %p54
      %p56 = scmp.ne.s32.totalorder %s45, %s48
      %p57 = scmp.eq.s32.totalorder %s24, 1
      %p58 = por %p56, %p57
      %p59 = scmp.ne.s32.totalorder %s48, %s49
      %p60 = scmp.eq.s32.totalorder %s24, 0
      %p61 = por %p59, %p60
      %p62 = scmp.ne.s32.totalorder %s48, %s49
      %p63 = scmp.eq.s32.totalorder %s25, 1
      %p64 = por %p62, %p63
      %p66 = scmp.ne.s32.totalorder %s49, %s65
      %p67 = scmp.eq.s32.totalorder %s25, 0
      %p68 = por %p66, %p67
      %s70 = sadd.s32 %s69, 1
      %p73 = scmp.eq.s32.totalorder %s19, 1
      %p74 = scmp.ne.s32.totalorder %s69, %s71
      %p75 = scmp.eq.s32.totalorder %s19, 0
      %p76 = por %p74, %p75
      %p77 = scmp.ne.s32.totalorder %s69, %s71
      %p78 = scmp.eq.s32.totalorder %s24, 1
      %p79 = por %p77, %p78
      %p80 = scmp.ne.s32.totalorder %s71, %s72
      %p81 = scmp.eq.s32.totalorder %s24, 0
      %p82 = por %p80, %p81
      %p83 = scmp.ne.s32.totalorder %s71, %s72
      %p84 = scmp.eq.s32.totalorder %s25, 1
      %p85 = por %p83, %p84
      %p87 = scmp.ne.s32.totalorder %s72, %s86
      %p88 = scmp.eq.s32.totalorder %s25, 0
      %p89 = por %p87, %p88
      %s91 = sadd.s32 %s90, 1
      %p94 = scmp.eq.s32.totalorder %s19, 1
      %p95 = scmp.ne.s32.totalorder %s90, %s92
      %p96 = scmp.eq.s32.totalorder %s19, 0
      %p97 = por %p95, %p96
      %p98 = scmp.ne.s32.totalorder %s90, %s92
      %p99 = scmp.eq.s32.totalorder %s24, 1
      %p100 = por %p98, %p99
      %p101 = scmp.ne.s32.totalorder %s92, %s93
      %p102 = scmp.eq.s32.totalorder %s24, 0
      %p103 = por %p101, %p102
      %p104 = scmp.ne.s32.totalorder %s92, %s93
      %p105 = scmp.eq.s32.totalorder %s25, 1
      %p106 = por %p104, %p105
      %p108 = scmp.ne.s32.totalorder %s93, %s107
      %p109 = scmp.eq.s32.totalorder %s25, 0
      %p110 = por %p108, %p109
      %s112 = sadd.s32 %s111, 1
      %p115 = scmp.eq.s32.totalorder %s19, 1
      %p116 = scmp.ne.s32.totalorder %s111, %s113
      %p117 = scmp.eq.s32.totalorder %s19, 0
      %p118 = por %p116, %p117
      %p119 = scmp.ne.s32.totalorder %s111, %s113
      %p120 = scmp.eq.s32.totalorder %s24, 1
      %p121 = por %p119, %p120
      %p122 = scmp.ne.s32.totalorder %s113, %s114
      %p123 = scmp.eq.s32.totalorder %s24, 0
      %p124 = por %p122, %p123
      %p125 = scmp.ne.s32.totalorder %s113, %s114
      %p126 = scmp.eq.s32.totalorder %s25, 1
      %p127 = por %p125, %p126
      %p129 = scmp.ne.s32.totalorder %s114, %s128
      %p130 = scmp.eq.s32.totalorder %s25, 0
      %p131 = por %p129, %p130
      %s133 = sadd.s32 %s132, 1
      %p136 = scmp.eq.s32.totalorder %s19, 1
      %p137 = scmp.ne.s32.totalorder %s132, %s134
      %p138 = scmp.eq.s32.totalorder %s19, 0
      %p139 = por %p137, %p138
      %p140 = scmp.ne.s32.totalorder %s132, %s134
      %p141 = scmp.eq.s32.totalorder %s24, 1
      %p142 = por %p140, %p141
      %p143 = scmp.ne.s32.totalorder %s134, %s135
      %p144 = scmp.eq.s32.totalorder %s24, 0
      %p145 = por %p143, %p144
      %p146 = scmp.ne.s32.totalorder %s134, %s135
      %p147 = scmp.eq.s32.totalorder %s25, 1
      %p148 = por %p146, %p147
      %p150 = scmp.ne.s32.totalorder %s135, %s149
      %p151 = scmp.eq.s32.totalorder %s25, 0
      %p152 = por %p150, %p151
      %s154 = sadd.s32 %s153, 1
      %p157 = scmp.eq.s32.totalorder %s19, 1
      %p158 = scmp.ne.s32.totalorder %s153, %s155
      %p159 = scmp.eq.s32.totalorder %s19, 0
      %p160 = por %p158, %p159
      %p161 = scmp.ne.s32.totalorder %s153, %s155
      %p162 = scmp.eq.s32.totalorder %s24, 1
      %p163 = por %p161, %p162
      %p164 = scmp.ne.s32.totalorder %s155, %s156
      %p165 = scmp.eq.s32.totalorder %s24, 0
      %p166 = por %p164, %p165
      %p167 = scmp.ne.s32.totalorder %s155, %s156
      %p168 = scmp.eq.s32.totalorder %s25, 1
      %p169 = por %p167, %p168
      %p171 = scmp.ne.s32.totalorder %s156, %s170
      %p172 = scmp.eq.s32.totalorder %s25, 0
      %p173 = por %p171, %p172
      %s174 = smul.u32 %s27, %s26
      %s175 = smul.u32 %s34, %s38
      %s176 = ssub.s32 %s174, %s175
      %p177 = scmp.eq.s32.totalorder %s176, 0
      %s179 = sadd.s32 %s178, 1
      %s180 = scalar_select %p177, %s178, %s179
      %p183 = pneg %p177
      %p184 = scmp.eq.s32.totalorder %s19, 1
      %p185 = por %p183, %p184
      %p186 = scmp.ne.s32.totalorder %s178, %s181
      %p187 = scmp.eq.s32.totalorder %s19, 0
      %p188 = por %p186, %p187
      %p189 = scmp.ne.s32.totalorder %s178, %s181
      %p190 = scmp.eq.s32.totalorder %s24, 1
      %p191 = por %p189, %p190
      %p192 = scmp.ne.s32.totalorder %s181, %s182
      %p193 = scmp.eq.s32.totalorder %s24, 0
      %p194 = por %p192, %p193
      %p195 = scmp.ne.s32.totalorder %s181, %s182
      %p196 = scmp.eq.s32.totalorder %s25, 1
      %p197 = por %p195, %p196
      %p199 = scmp.ne.s32.totalorder %s182, %s198
      %p200 = scmp.eq.s32.totalorder %s25, 0
      %p201 = por %p199, %p200
      %p202 = scmp.le.s32.totalorder 1, %s19
      %p203 = scmp.lt.s32.totalorder %s19, 3
      %p204 = pnand %p202, %p203
      %p205 = pneg %p204
      // Predicated region
      $region9: #{tpu_custom_call.1} parent=5 // pred_check
        _
      $region10: #{tpu_custom_call.1} parent=5 // pred_check_branch
        %207 = sbr.rel (%p204) target = $region12
      $region11: #{tpu_custom_call.1} parent=5 // pred_region
        %s208 = ssub.s32 %s19, 1
        // Predicated region
        $region13: #{tpu_custom_call.1} parent=11 // pred_check
          %p209 = pneg %p82
        $region14: #{tpu_custom_call.1} parent=11 // pred_check_branch
          %211 = sbr.rel (%p209) target = $region16
        $region15: #{tpu_custom_call.1} parent=11 // pred_region
          %213 = vsyncadd [#allocation11], 0
          %s214 = sshll.u32 %s1, 4
          %s215 = int_to_ptr.hbm [resolvable:$true] %s214
          %s216 = sshll.u32 [#allocation10], 4
          %s217 = int_to_ptr.vmem [resolvable:$true] %s216
          %222 = dma.hbm_to_vmem [thread:$0]  %s215, 1024, %s217, [#allocation11], 64, 64, 4
        $region16: #{tpu_custom_call.1} parent=11 // pred_fallthru
          _
        // Predicated region
        $region17: #{tpu_custom_call.1} parent=11 // pred_check
          %p223 = pneg %p103
        $region18: #{tpu_custom_call.1} parent=11 // pred_check_branch
          %225 = sbr.rel (%p223) target = $region20
        $region19: #{tpu_custom_call.1} parent=11 // pred_region
          _
        $region20: #{tpu_custom_call.1} parent=11 // pred_fallthru
          _
        // Predicated region
        $region21: #{tpu_custom_call.1} parent=11 // pred_check
          %p226 = pneg %p124
        $region22: #{tpu_custom_call.1} parent=11 // pred_check_branch
          %228 = sbr.rel (%p226) target = $region24
        $region23: #{tpu_custom_call.1} parent=11 // pred_region
          _
        $region24: #{tpu_custom_call.1} parent=11 // pred_fallthru
          _
        // Predicated region
        $region25: #{tpu_custom_call.1} parent=11 // pred_check
          %p229 = pneg %p145
        $region26: #{tpu_custom_call.1} parent=11 // pred_check_branch
          %231 = sbr.rel (%p229) target = $region28
        $region27: #{tpu_custom_call.1} parent=11 // pred_region
          %233 = vsyncadd [#allocation11], 0
          %s234 = sshll.u32 %s4, 4
          %s235 = int_to_ptr.hbm [resolvable:$true] %s234
          %s236 = sshll.u32 [#allocation12], 4
          %s237 = int_to_ptr.vmem [resolvable:$true] %s236
          %242 = dma.hbm_to_vmem [thread:$0]  %s235, 1024, %s237, [#allocation11], 64, 64, 4
        $region28: #{tpu_custom_call.1} parent=11 // pred_fallthru
          _
        // Predicated region
        $region29: #{tpu_custom_call.1} parent=11 // pred_check
          %p243 = pneg %p166
        $region30: #{tpu_custom_call.1} parent=11 // pred_check_branch
          %245 = sbr.rel (%p243) target = $region32
        $region31: #{tpu_custom_call.1} parent=11 // pred_region
          _
        $region32: #{tpu_custom_call.1} parent=11 // pred_fallthru
          _
      $region12: #{tpu_custom_call.1} parent=5 // pred_fallthru
        _
      %p246 = scmp.lt.s32.totalorder %s19, 2
      // Predicated region
      $region33: #{tpu_custom_call.1} parent=5 // pred_check
        %p247 = pneg %p246
      $region34: #{tpu_custom_call.1} parent=5 // pred_check_branch
        %249 = sbr.rel (%p247) target = $region36
      $region35: #{tpu_custom_call.1} parent=5 // pred_region
        // Predicated region
        $region37: #{tpu_custom_call.1} parent=35 // pred_check
          %p250 = pneg %p55
        $region38: #{tpu_custom_call.1} parent=35 // pred_check_branch
          %252 = sbr.rel (%p250) target = $region40
        $region39: #{tpu_custom_call.1} parent=35 // pred_region
          %s253 = sand.u32 %s45, 1
          %s254 = scalar_lea.sflag [#allocation8], %s253
          %s255 = sand.u32 %s45, 1
          %s256 = smul.addr %s255, 4
          %s257 = scalar_lea.vmem [#allocation7], %s256
          %s258 = ssub.s32 1, %s26
          %s259 = smul.u32 %s27, %s258
          %261 = vsyncadd %s254, 0
          %s262 = smul.addr %s259, 4
          %s263 = scalar_lea.hbm %s0, %s262
          %s265 = sshll.u32 %s263, 4
          %s266 = int_to_ptr.hbm [resolvable:$true] %s265
          %s267 = sshll.u32 %s257, 4
          %s268 = int_to_ptr.vmem [resolvable:$true] %s267
          %270 = dma.hbm_to_vmem [thread:$0]  %s266, 64, %s268, %s254
        $region40: #{tpu_custom_call.1} parent=35 // pred_fallthru
          _
      $region36: #{tpu_custom_call.1} parent=5 // pred_fallthru
        _
      %p271 = scmp.le.s32.totalorder 1, %s19
      %p272 = scmp.lt.s32.totalorder %s19, 3
      %p273 = pnand %p271, %p272
      %p274 = pneg %p273
      // Predicated region
      $region41: #{tpu_custom_call.1} parent=5 // pred_check
        _
      $region42: #{tpu_custom_call.1} parent=5 // pred_check_branch
        %276 = sbr.rel (%p273) target = $region44
      $region43: #{tpu_custom_call.1} parent=5 // pred_region
        %s277 = ssub.s32 %s19, 1
        %s278 = sand.u32 %s48, 1
        %s279 = scalar_lea.sflag [#allocation8], %s278
        %s280 = sand.u32 %s48, 1
        %s281 = smul.addr %s280, 4
        %s282 = scalar_lea.vmem [#allocation7], %s281
        // Predicated region
        $region45: #{tpu_custom_call.1} parent=43 // pred_check
          %p283 = pneg %p61
        $region46: #{tpu_custom_call.1} parent=43 // pred_check_branch
          %285 = sbr.rel (%p283) target = $region48
        $region47: #{tpu_custom_call.1} parent=43 // pred_region
          %287 = dma.done %s279, 64
        $region48: #{tpu_custom_call.1} parent=43 // pred_fallthru
          _
        // Predicated region
        $region49: #{tpu_custom_call.1} parent=43 // pred_check
          %p288 = pneg %p82
        $region50: #{tpu_custom_call.1} parent=43 // pred_check_branch
          %290 = sbr.rel (%p288) target = $region52
        $region51: #{tpu_custom_call.1} parent=43 // pred_region
          %292 = dma.done [#allocation11], 1024
        $region52: #{tpu_custom_call.1} parent=43 // pred_fallthru
          _
        // Predicated region
        $region53: #{tpu_custom_call.1} parent=43 // pred_check
          %p293 = pneg %p145
        $region54: #{tpu_custom_call.1} parent=43 // pred_check_branch
          %295 = sbr.rel (%p293) target = $region56
        $region55: #{tpu_custom_call.1} parent=43 // pred_region
          %297 = dma.done [#allocation11], 1024
        $region56: #{tpu_custom_call.1} parent=43 // pred_fallthru
          _
        %s298 = sand.u32 %s48, 1
        %s299 = scalar_lea.sflag [#allocation8], %s298
        %s300 = sand.u32 %s48, 1
        %s301 = smul.addr %s300, 4
        %s302 = scalar_lea.vmem [#allocation7], %s301
        %p303 = pneg %p61
        %p304 = pneg %p58
        %p305 = pneg %p82
        %p306 = pneg %p79
        %p307 = pneg %p103
        %p308 = pneg %p100
        %p309 = pneg %p124
        %p310 = pneg %p121
        %p311 = pneg %p145
        %p312 = pneg %p142
        %p313 = pneg %p166
        %p314 = pneg %p163
        %p315 = pneg %p194
        %p316 = pneg %p191
        %s317 = sand.u32 %s181, 1
        %s318 = scalar_lea.sflag [#allocation9], %s317
        %s319 = sand.u32 %s181, 1
        %s320 = smul.addr %s319, 8
        %s321 = scalar_lea.vmem [#allocation13], %s320
        %s322 = ssub.s32 1, %s28
        %s323 = smul.u32 %s29, %s322
        %s324 = smul.u32 %s29, %s28
        %p325 = scmp.eq.s32.totalorder %s28, 0
        // Predicated region
        $region57: #{tpu_custom_call.1} parent=43 // pred_check
          %p326 = pneg %p325
        $region58: #{tpu_custom_call.1} parent=43 // pred_check_branch
          %328 = sbr.rel (%p326) target = $region60
        $region59: #{tpu_custom_call.1} parent=43 // pred_region
          %p329 = scmp.eq.s32.totalorder %s29, 0
          // Predicated region
          $region61: #{tpu_custom_call.1} parent=59 // pred_check
            %p330 = pneg %p329
          $region62: #{tpu_custom_call.1} parent=59 // pred_check_branch
            %332 = sbr.rel (%p330) target = $region64
          $region63: #{tpu_custom_call.1} parent=59 // pred_region
            %333 = vst [vmem:[#allocation2] sm:$0x1] 0.0
            %334 = vst [vmem:[#allocation3] sm:$0x1] 0.0
          $region64: #{tpu_custom_call.1} parent=59 // pred_fallthru
            _
          %v335 = vld [vmem:[%s282] sm:$0xf]
          %v336 = vld [vmem:[#allocation10] sm:$0xf]
          %v337 = vld [vmem:[#allocation10 + $0x4] sm:$0xf]
          %v338 = vld [vmem:[#allocation10 + $0x8] sm:$0xf]
          %v339 = vld [vmem:[#allocation10 + $0xc] sm:$0xf]
          %v340 = vld [vmem:[#allocation10 + $0x10] sm:$0xf]
          %v341 = vld [vmem:[#allocation10 + $0x14] sm:$0xf]
          %v342 = vld [vmem:[#allocation10 + $0x18] sm:$0xf]
          %v343 = vld [vmem:[#allocation10 + $0x1c] sm:$0xf]
          %v344 = vld [vmem:[#allocation10 + $0x20] sm:$0xf]
          %v345 = vld [vmem:[#allocation10 + $0x24] sm:$0xf]
          %v346 = vld [vmem:[#allocation10 + $0x28] sm:$0xf]
          %v347 = vld [vmem:[#allocation10 + $0x2c] sm:$0xf]
          %v348 = vld [vmem:[#allocation10 + $0x30] sm:$0xf]
          %v349 = vld [vmem:[#allocation10 + $0x34] sm:$0xf]
          %v350 = vld [vmem:[#allocation10 + $0x38] sm:$0xf]
          %v351 = vld [vmem:[#allocation10 + $0x3c] sm:$0xf]
          %v368 = vunpack.c.l.b16 %v336
          %v369 = vunpack.c.l.b16 %v337
          %v370 = vunpack.c.l.b16 %v338
          %v371 = vunpack.c.l.b16 %v339
          %v372 = vunpack.c.l.b16 %v340
          %v373 = vunpack.c.l.b16 %v341
          %v374 = vunpack.c.l.b16 %v342
          %v375 = vunpack.c.l.b16 %v343
          %v376 = vunpack.c.l.b16 %v344
          %v377 = vunpack.c.l.b16 %v345
          %v378 = vunpack.c.l.b16 %v346
          %v379 = vunpack.c.l.b16 %v347
          %v380 = vunpack.c.l.b16 %v348
          %v381 = vunpack.c.l.b16 %v349
          %v382 = vunpack.c.l.b16 %v350
          %v383 = vunpack.c.l.b16 %v351
          %v384 = vpack.c.b16 %v369, %v368
          %v385 = vpack.c.b16 %v371, %v370
          %v386 = vpack.c.b16 %v373, %v372
          %v387 = vpack.c.b16 %v375, %v374
          %v388 = vpack.c.b16 %v377, %v376
          %v389 = vpack.c.b16 %v379, %v378
          %v390 = vpack.c.b16 %v381, %v380
          %v391 = vpack.c.b16 %v383, %v382
          %400 = vmatpush.bf16.msra.mxu0 %v391
          %401 = vmatpush.bf16.msra.mxu0 %v390
          %402 = vmatpush.bf16.msra.mxu0 %v389
          %403 = vmatpush.bf16.msra.mxu0 %v388
          %404 = vmatpush.bf16.msra.mxu0 %v387
          %405 = vmatpush.bf16.msra.mxu0 %v386
          %406 = vmatpush.bf16.msra.mxu0 %v385
          %407 = vmatpush.bf16.msra.mxu0 %v384
          %408 = vmatmul.bf16.gmra.mxu0 %v335
          %v409 = vpop.f32.mrf.mxu0
          %v410 = vadd.f32 0.0, %v409
          %v411 = vpop.f32.mrf.mxu0
          %412 = vdwg.mxu0
          %s413 = smul.u32 %s29, 8
          %s414 = scalar_lea.vmem [#allocation6], %s413
          %415 = vst [vmem:[%s414] sm:$0xff] %v410
          %v416 = vld [vmem:[#allocation2] sm:$0x1]
          %v417 = vrot.slane %v410, 4
          %v418 = vadd.f32 %v410, %v417
          %v419 = vrot.slane %v418, 2
          %v420 = vadd.f32 %v418, %v419
          %v421 = vrot.slane %v420, 1
          %v422 = vadd.f32 %v420, %v421
          %v423 = vadd.f32 %v416, %v422
          %424 = vst [vmem:[#allocation2] sm:$0x1] %v423
          %v425 = vld [vmem:[#allocation3] sm:$0x1]
          %v426 = vmul.f32 %v410, %v410
          %v427 = vrot.slane %v426, 4
          %v428 = vadd.f32 %v426, %v427
          %v429 = vrot.slane %v428, 2
          %v430 = vadd.f32 %v428, %v429
          %v431 = vrot.slane %v430, 1
          %v432 = vadd.f32 %v430, %v431
          %v433 = vadd.f32 %v425, %v432
          %434 = vst [vmem:[#allocation3] sm:$0x1] %v433
        $region60: #{tpu_custom_call.1} parent=43 // pred_fallthru
          _
        %p435 = scmp.eq.s32.totalorder %s28, 1
        // Predicated region
        $region65: #{tpu_custom_call.1} parent=43 // pred_check
          %p436 = pneg %p435
        $region66: #{tpu_custom_call.1} parent=43 // pred_check_branch
          %438 = sbr.rel (%p436) target = $region68
        $region67: #{tpu_custom_call.1} parent=43 // pred_region
          %p439 = scmp.eq.s32.totalorder %s29, 0
          // Predicated region
          $region69: #{tpu_custom_call.1} parent=67 // pred_check
            %p440 = pneg %p439
          $region70: #{tpu_custom_call.1} parent=67 // pred_check_branch
            %442 = sbr.rel (%p440) target = $region72
          $region71: #{tpu_custom_call.1} parent=67 // pred_region
            %v443 = vld [vmem:[#allocation2] sm:$0x1]
            %v444 = vmul.f32 %v443, 0.125
            %v445 = vld [vmem:[#allocation3] sm:$0x1]
            %v446 = vmul.f32 %v445, 0.125
            %v447 = vmul.f32 %v444, %v444
            %v448 = vsub.f32 %v446, %v447
            %v449 = vmax.f32 %v448, 0.0
            %v450 = vld [vmem:[%s2] sm:$0x1]
            %v451 = vadd.f32 %v449, 1e-05
            %v452 = vrsqrt.pop %v451
            %v453 = vmul.f32 %v452, %v451
            %v454 = vmul.f32 %v453, %v452
            %v455 = vmul.f32 0.5, %v454
            %v456 = vsub.f32 1.5, %v455
            %v457 = vmul.f32 %v452, %v456
            %vm458 = vweird.f32 %v451
            %vm459 = vweird.f32 %v452
            %vm460 = vmor %vm458, %vm459
            %v461 = vsel %vm460, %v452, %v457
            %v462 = vmul.f32 %v450, %v461
            %463 = vst [vmem:[#allocation4] sm:$0x1] %v462
            %v464 = vld [vmem:[%s3] sm:$0x1]
            %v465 = vmul.f32 %v444, %v462
            %v466 = vsub.f32 %v464, %v465
            %467 = vst [vmem:[#allocation5] sm:$0x1] %v466
          $region72: #{tpu_custom_call.1} parent=67 // pred_fallthru
            _
          %s468 = smul.u32 %s29, 8
          %s469 = scalar_lea.vmem [#allocation6], %s468
          %v470 = vld [vmem:[%s469] sm:$0xff]
          %v471 = vld [vmem:[#allocation4] sm:$0x1]
          %v473 = vperm.slane %v471, 0
          %v475 = vmul.f32 %v470, %v473
          %v476 = vld [vmem:[#allocation5] sm:$0x1]
          %v478 = vperm.slane %v476, 0
          %v480 = vadd.f32 %v475, %v478
          %v481 = vmax.f32 %v480, 0.0
          %v482 = vpack.c.bf16 %v481, %v481
          %v483 = vld [vmem:[#allocation12] sm:$0xf]
          %v484 = vld [vmem:[#allocation12 + $0x4] sm:$0xf]
          %v485 = vld [vmem:[#allocation12 + $0x8] sm:$0xf]
          %v486 = vld [vmem:[#allocation12 + $0xc] sm:$0xf]
          %v487 = vld [vmem:[#allocation12 + $0x10] sm:$0xf]
          %v488 = vld [vmem:[#allocation12 + $0x14] sm:$0xf]
          %v489 = vld [vmem:[#allocation12 + $0x18] sm:$0xf]
          %v490 = vld [vmem:[#allocation12 + $0x1c] sm:$0xf]
          %v491 = vld [vmem:[#allocation12 + $0x20] sm:$0xf]
          %v492 = vld [vmem:[#allocation12 + $0x24] sm:$0xf]
          %v493 = vld [vmem:[#allocation12 + $0x28] sm:$0xf]
          %v494 = vld [vmem:[#allocation12 + $0x2c] sm:$0xf]
          %v495 = vld [vmem:[#allocation12 + $0x30] sm:$0xf]
          %v496 = vld [vmem:[#allocation12 + $0x34] sm:$0xf]
          %v497 = vld [vmem:[#allocation12 + $0x38] sm:$0xf]
          %v498 = vld [vmem:[#allocation12 + $0x3c] sm:$0xf]
          %v499 = vld [vmem:[%s5] sm:$0x1]
          %v501 = vperm.slane %v499, 0
          %v519 = vunpack.c.l.b16 %v483
          %v520 = vunpack.c.l.b16 %v484
          %v521 = vunpack.c.l.b16 %v485
          %v522 = vunpack.c.l.b16 %v486
          %v523 = vunpack.c.l.b16 %v487
          %v524 = vunpack.c.l.b16 %v488
          %v525 = vunpack.c.l.b16 %v489
          %v526 = vunpack.c.l.b16 %v490
          %v527 = vunpack.c.l.b16 %v491
          %v528 = vunpack.c.l.b16 %v492
          %v529 = vunpack.c.l.b16 %v493
          %v530 = vunpack.c.l.b16 %v494
          %v531 = vunpack.c.l.b16 %v495
          %v532 = vunpack.c.l.b16 %v496
          %v533 = vunpack.c.l.b16 %v497
          %v534 = vunpack.c.l.b16 %v498
          %v535 = vpack.c.b16 %v520, %v519
          %v536 = vpack.c.b16 %v522, %v521
          %v537 = vpack.c.b16 %v524, %v523
          %v538 = vpack.c.b16 %v526, %v525
          %v539 = vpack.c.b16 %v528, %v527
          %v540 = vpack.c.b16 %v530, %v529
          %v541 = vpack.c.b16 %v532, %v531
          %v542 = vpack.c.b16 %v534, %v533
          %551 = vmatpush.bf16.msra.mxu0 %v542
          %552 = vmatpush.bf16.msra.mxu0 %v541
          %553 = vmatpush.bf16.msra.mxu0 %v540
          %554 = vmatpush.bf16.msra.mxu0 %v539
          %555 = vmatpush.bf16.msra.mxu0 %v538
          %556 = vmatpush.bf16.msra.mxu0 %v537
          %557 = vmatpush.bf16.msra.mxu0 %v536
          %558 = vmatpush.bf16.msra.mxu0 %v535
          %559 = vmatmul.bf16.gmra.mxu0 %v482
          %v560 = vpop.f32.mrf.mxu0
          %v561 = vadd.f32 %v501, %v560
          %v562 = vpop.f32.mrf.mxu0
          %563 = vdwg.mxu0
          %v564 = vmul.f32 %v561, %v561
          %565 = vadd.xlane.f32.xlu0 %v564
          %v566 = vpop.xlane.xlu0 %565
          %v567 = vmax.f32 %v566, 1e-24
          %v568 = vrsqrt.pop %v567
          %v569 = vmul.f32 %v568, %v567
          %v570 = vmul.f32 %v569, %v568
          %v571 = vmul.f32 0.5, %v570
          %v572 = vsub.f32 1.5, %v571
          %v573 = vmul.f32 %v568, %v572
          %vm574 = vweird.f32 %v567
          %vm575 = vweird.f32 %v568
          %vm576 = vmor %vm574, %vm575
          %v577 = vsel %vm576, %v568, %v573
          %v578 = vmul.f32 %v561, %v577
          %579 = vst [vmem:[%s321] sm:$0xff] %v578
        $region68: #{tpu_custom_call.1} parent=43 // pred_fallthru
          _
        %s580 = sand.u32 %s181, 1
        %s581 = scalar_lea.sflag [#allocation9], %s580
        %s582 = sand.u32 %s181, 1
        %s583 = smul.addr %s582, 8
        %s584 = scalar_lea.vmem [#allocation13], %s583
        // Predicated region
        $region73: #{tpu_custom_call.1} parent=43 // pred_check
          %p585 = pneg %p191
        $region74: #{tpu_custom_call.1} parent=43 // pred_check_branch
          %587 = sbr.rel (%p585) target = $region76
        $region75: #{tpu_custom_call.1} parent=43 // pred_region
          %s588 = smul.u32 %s29, %s28
          %590 = vsyncadd %s581, 0
          %s591 = smul.addr %s588, 8
          %s592 = scalar_lea.hbm %s6, %s591
          %s594 = sshll.u32 %s584, 4
          %s595 = int_to_ptr.vmem [resolvable:$true] %s594
          %s596 = sshll.u32 %s592, 4
          %s597 = int_to_ptr.hbm [resolvable:$true] %s596
          %599 = dma.vmem_to_hbm [thread:$0]  %s595, 128, %s597, %s581
        $region76: #{tpu_custom_call.1} parent=43 // pred_fallthru
          _
      $region44: #{tpu_custom_call.1} parent=5 // pred_fallthru
        _
      %p600 = scmp.le.s32.totalorder 2, %s19
      // Predicated region
      $region77: #{tpu_custom_call.1} parent=5 // pred_check
        %p601 = pneg %p600
      $region78: #{tpu_custom_call.1} parent=5 // pred_check_branch
        %603 = sbr.rel (%p601) target = $region80
      $region79: #{tpu_custom_call.1} parent=5 // pred_region
        %s604 = ssub.s32 %s19, 2
        // Predicated region
        $region81: #{tpu_custom_call.1} parent=79 // pred_check
          %p605 = pneg %p197
        $region82: #{tpu_custom_call.1} parent=79 // pred_check_branch
          %607 = sbr.rel (%p605) target = $region84
        $region83: #{tpu_custom_call.1} parent=79 // pred_region
          %s608 = sand.u32 %s182, 1
          %s609 = scalar_lea.sflag [#allocation9], %s608
          %s610 = sand.u32 %s182, 1
          %s611 = smul.addr %s610, 8
          %s612 = scalar_lea.vmem [#allocation13], %s611
          %614 = dma.done %s609, 128
        $region84: #{tpu_custom_call.1} parent=79 // pred_fallthru
          _
      $region80: #{tpu_custom_call.1} parent=5 // pred_fallthru
        _
    $region6: #{tpu_custom_call.1} parent=1 // loop_footer
      %s23 = sadd.s32 1, %s19
    $region7: #{tpu_custom_call.1} parent=1 // loop_footer_branch
      %18 = sbr.rel target = $region3
    $region8: #{tpu_custom_call.1} parent=1 // loop_exit
      _
    %615 = vsyncpa [#allocation8], 1
    %s616 = scalar_lea.sflag [#allocation8], 1
    %617 = vsyncpa %s616, 1
    %618 = vsyncpa [#allocation11], 1
    %619 = vsyncpa [#allocation9], 1
    %s620 = scalar_lea.sflag [#allocation9], 1
    %621 = vsyncpa %s620, 1

</llo_original>
